<compile_context>
chip_gen: v5e
topology: v5e:2x2
jax: 0.10.0
libtpu: 0.0.40
codegen_flags: <defaults>
</compile_context>

<pallas_src>
import math

import jax
import jax.numpy as jnp
from jax.experimental import pallas as pl
from jax.experimental.pallas import tpu as pltpu

INPUT_SIZE = 3 * 32 * 32   # 3072
HIDDEN1 = 100
HIDDEN2 = 100
HIDDEN3 = 100
OUTPUT_SIZE = 10

HID_PAD = 128              # 100 -> 128 (lane-aligned; do NOT widen to 256)
OUT_PAD = 128              # 10  -> 128 (lane-dense output store)
TN_MAX = 1024              # batch tile (bf16 x tile: 2 x 6 MiB double-buffered)
MIN_SPLIT_TILE = 256       # only split the grid once tiles stay >= this big


def _mlp_kernel(x_ref,
                w1_ref, b1_ref,
                w2_ref, b2_ref,
                w3_ref, b3_ref,
                w4_ref, b4_ref,
                out_ref):
    """One batch tile per grid step; all (padded, bf16) weights are VMEM-resident.

    Operands are bf16 (MXU-native); accumulation, bias add and sigmoid are f32.
    """
    x = x_ref[...]                                                    # (TN, 3072) bf16

    h = jnp.dot(x, w1_ref[...], preferred_element_type=jnp.float32) + b1_ref[...]
    h = jax.nn.sigmoid(h)                                             # (TN, 128) f32

    h = jnp.dot(h.astype(jnp.bfloat16), w2_ref[...],
                preferred_element_type=jnp.float32) + b2_ref[...]
    h = jax.nn.sigmoid(h)                                             # (TN, 128) f32

    h = jnp.dot(h.astype(jnp.bfloat16), w3_ref[...],
                preferred_element_type=jnp.float32) + b3_ref[...]
    h = jax.nn.sigmoid(h)                                             # (TN, 128) f32

    out = jnp.dot(h.astype(jnp.bfloat16), w4_ref[...],
                  preferred_element_type=jnp.float32) + b4_ref[...]
    out_ref[...] = out.astype(out_ref.dtype)                          # (TN, 128) f32


def _pad2(a, rows, cols, dtype):
    """Zero-pad a 2-D array up to (rows, cols) and cast."""
    return jnp.pad(a, ((0, rows - a.shape[0]), (0, cols - a.shape[1]))).astype(dtype)


def _choose_batch_tile(n):
    """Multiple-of-8 (sublane) rows, capped at TN_MAX.

    Once the batch is big enough that halving the tile still leaves >=
    MIN_SPLIT_TILE rows per step, pick ~half the batch so the grid has >= 2
    steps and v7x's second TensorCore gets work (harmless on v5e/v6e)."""
    n8 = max(8, ((n + 7) // 8) * 8)
    if n8 >= 2 * MIN_SPLIT_TILE:
        half = ((n8 // 2 + 7) // 8) * 8
        return min(half, TN_MAX)
    return min(n8, TN_MAX)


def neural_net_sigmoid_vanish(x, params):
    """x: (N, 3, 32, 32) or anything flattenable to (N, 3072) — mirrors
    x.view(-1, 3072) from the PyTorch forward.  Returns (N, 10) float32."""
    x2d = jnp.reshape(x, (-1, INPUT_SIZE)).astype(jnp.bfloat16)   # bf16 HBM stream
    n = x2d.shape[0]

    tn = _choose_batch_tile(n)
    n_pad = ((n + tn - 1) // tn) * tn
    if n_pad != n:
        x2d = jnp.pad(x2d, ((0, n_pad - n), (0, 0)))
    grid = (n_pad // tn,)

    (w1, b1), (w2, b2), (w3, b3), (w4, b4) = params

    # Zero-pad weights/biases to lane-aligned widths; weights stream as bf16,
    # biases stay f32 (tiny, added to the f32 accumulator).  Zero ROWS in the
    # next layer's weight kill the sigmoid(0)=0.5 contributions of padded cols.
    w1p = _pad2(w1, INPUT_SIZE, HID_PAD, jnp.bfloat16)
    b1p = _pad2(b1, 1, HID_PAD, jnp.float32)
    w2p = _pad2(w2, HID_PAD, HID_PAD, jnp.bfloat16)
    b2p = _pad2(b2, 1, HID_PAD, jnp.float32)
    w3p = _pad2(w3, HID_PAD, HID_PAD, jnp.bfloat16)
    b3p = _pad2(b3, 1, HID_PAD, jnp.float32)
    w4p = _pad2(w4, HID_PAD, OUT_PAD, jnp.bfloat16)
    b4p = _pad2(b4, 1, OUT_PAD, jnp.float32)

    resident = lambda shape: pl.BlockSpec(shape, lambda i: (0, 0))

    in_specs = [
        pl.BlockSpec((tn, INPUT_SIZE), lambda i: (i, 0)),   # streamed batch tile
        resident((INPUT_SIZE, HID_PAD)), resident((1, HID_PAD)),
        resident((HID_PAD, HID_PAD)),    resident((1, HID_PAD)),
        resident((HID_PAD, HID_PAD)),    resident((1, HID_PAD)),
        resident((HID_PAD, OUT_PAD)),    resident((1, OUT_PAD)),
    ]
    out_specs = pl.BlockSpec((tn, OUT_PAD), lambda i: (i, 0))

    # HBM byte counts (bf16 weights + x, f32 biases + output).
    weight_bytes = 2 * (INPUT_SIZE * HID_PAD + 2 * HID_PAD * HID_PAD
                        + HID_PAD * OUT_PAD)
    bias_bytes = 4 * (3 * HID_PAD + OUT_PAD)

    # VMEM budget: Mosaic double-buffers every input spec (even constant
    # index_maps), so count 2x for the x tile, the weights/biases and the
    # output tile, plus margin for activations / spill headroom.
    vmem_bytes = (2 * tn * INPUT_SIZE * 2            # x tile, bf16
                  + 2 * tn * OUT_PAD * 4             # out tile, f32
                  + 2 * (weight_bytes + bias_bytes)  # resident operands
                  + (6 << 20))                       # margin

    flops = 2 * n_pad * (INPUT_SIZE * HID_PAD + 2 * HID_PAD * HID_PAD
                         + HID_PAD * OUT_PAD)
    cost = pl.CostEstimate(
        flops=flops,
        transcendentals=3 * n_pad * HID_PAD,
        bytes_accessed=(n_pad * INPUT_SIZE * 2 + weight_bytes + bias_bytes
                        + n_pad * OUT_PAD * 4),
    )

    out = pl.pallas_call(
        _mlp_kernel,
        out_shape=jax.ShapeDtypeStruct((n_pad, OUT_PAD), jnp.float32),
        grid=grid,
        in_specs=in_specs,
        out_specs=out_specs,
        compiler_params=pltpu.CompilerParams(
            dimension_semantics=("parallel",),
            vmem_limit_bytes=int(vmem_bytes),
        ),
        cost_estimate=cost,
    )(x2d, w1p, b1p, w2p, b2p, w3p, b3p, w4p, b4p)

    return out[:n, :OUTPUT_SIZE]


def init_params(key):
    """Deterministic init mimicking nn.Linear default:
    U(-1/sqrt(fan_in), +1/sqrt(fan_in)) for both weight and bias.
    Weights returned as (in_features, out_features); biases as (1, out)."""
    dims = [(INPUT_SIZE, HIDDEN1),
            (HIDDEN1, HIDDEN2),
            (HIDDEN2, HIDDEN3),
            (HIDDEN3, OUTPUT_SIZE)]
    params = []
    for (fan_in, fan_out) in dims:
        key, kw, kb = jax.random.split(key, 3)
        bound = 1.0 / math.sqrt(fan_in)
        w = jax.random.uniform(kw, (fan_in, fan_out), jnp.float32, -bound, bound)
        b = jax.random.uniform(kb, (1, fan_out), jnp.float32, -bound, bound)
        params.append((w, b))
    return params


def _reference(x, params):
    """Plain-JAX f32 reference (same structure as the PyTorch forward)."""
    h = jnp.reshape(x, (-1, INPUT_SIZE)).astype(jnp.float32)
    (w1, b1), (w2, b2), (w3, b3), (w4, b4) = params
    h = jax.nn.sigmoid(h @ w1 + b1)
    h = jax.nn.sigmoid(h @ w2 + b2)
    h = jax.nn.sigmoid(h @ w3 + b3)
    return h @ w4 + b4


if __name__ == "__main__":
    key = jax.random.PRNGKey(0)
    key, kx = jax.random.split(key)

    # Small batch, shapes implied by the module: (N, 3, 32, 32) NCHW input.
    x = jax.random.normal(kx, (2, 3, 32, 32), dtype=jnp.float32)
    params = init_params(key)

    out = neural_net_sigmoid_vanish(x, params)
    out = jax.block_until_ready(out)

    ref = _reference(x, params)
    assert out.shape == (2, OUTPUT_SIZE)
    # bf16 operand streaming (matching the MXU's native precision) vs f32
    # reference: expect small-but-nonzero rounding differences.
    assert jnp.allclose(out, ref, atol=2e-2, rtol=2e-2)

    print("KERNEL_OK")
</pallas_src>

<mosaic_0001>
module attributes {stable_mosaic.version = 11 : i64} {
  func.func @_mlp_kernel(%arg0: i32, %arg1: memref<8x3072xbf16, #tpu.memory_space<vmem>>, %arg2: memref<3072x128xbf16, #tpu.memory_space<vmem>>, %arg3: memref<1x128xf32, #tpu.memory_space<vmem>>, %arg4: memref<128x128xbf16, #tpu.memory_space<vmem>>, %arg5: memref<1x128xf32, #tpu.memory_space<vmem>>, %arg6: memref<128x128xbf16, #tpu.memory_space<vmem>>, %arg7: memref<1x128xf32, #tpu.memory_space<vmem>>, %arg8: memref<128x128xbf16, #tpu.memory_space<vmem>>, %arg9: memref<1x128xf32, #tpu.memory_space<vmem>>, %arg10: memref<8x128xf32, #tpu.memory_space<vmem>>) attributes {dimension_semantics = [#tpu.dimension_semantics<parallel>], iteration_bounds = array<i64: 1>, scalar_prefetch = 0 : i64, scratch_operands = 0 : i64, tpu.core_type = #tpu.core_type<tc>, window_params = [{transform_indices = @transform_0, window_bounds = array<i64: 8, 3072>}, {pipeline_mode = #tpu.pipeline_mode<synchronous>, transform_indices = @transform_1, window_bounds = array<i64: 3072, 128>}, {pipeline_mode = #tpu.pipeline_mode<synchronous>, transform_indices = @transform_2, window_bounds = array<i64: 1, 128>}, {pipeline_mode = #tpu.pipeline_mode<synchronous>, transform_indices = @transform_3, window_bounds = array<i64: 128, 128>}, {pipeline_mode = #tpu.pipeline_mode<synchronous>, transform_indices = @transform_4, window_bounds = array<i64: 1, 128>}, {pipeline_mode = #tpu.pipeline_mode<synchronous>, transform_indices = @transform_5, window_bounds = array<i64: 128, 128>}, {pipeline_mode = #tpu.pipeline_mode<synchronous>, transform_indices = @transform_6, window_bounds = array<i64: 1, 128>}, {pipeline_mode = #tpu.pipeline_mode<synchronous>, transform_indices = @transform_7, window_bounds = array<i64: 128, 128>}, {pipeline_mode = #tpu.pipeline_mode<synchronous>, transform_indices = @transform_8, window_bounds = array<i64: 1, 128>}, {transform_indices = @transform_9, window_bounds = array<i64: 8, 128>}]} {
    %c0 = arith.constant 0 : index
    %c0_0 = arith.constant 0 : index
    %0 = vector.load %arg1[%c0, %c0_0] : memref<8x3072xbf16, #tpu.memory_space<vmem>>, vector<8x3072xbf16>
    %c0_1 = arith.constant 0 : index
    %c0_2 = arith.constant 0 : index
    %1 = vector.load %arg2[%c0_1, %c0_2] : memref<3072x128xbf16, #tpu.memory_space<vmem>>, vector<3072x128xbf16>
    %cst = arith.constant dense<0.000000e+00> : vector<8x128xf32>
    %2 = tpu.matmul %0, %1, %cst {dimension_numbers = #tpu.dot_dimension_numbers<[1], [0], [0], [1], [0, 0, 1, 1], [], []>} : vector<8x3072xbf16>, vector<3072x128xbf16>, vector<8x128xf32> -> vector<8x128xf32>
    %c0_3 = arith.constant 0 : index
    %c0_4 = arith.constant 0 : index
    %3 = vector.load %arg3[%c0_3, %c0_4] : memref<1x128xf32, #tpu.memory_space<vmem>>, vector<1x128xf32>
    %4 = vector.broadcast %3 : vector<1x128xf32> to vector<8x128xf32>
    %5 = arith.addf %2, %4 : vector<8x128xf32>
    %6 = arith.negf %5 : vector<8x128xf32>
    %7 = math.exp %6 : vector<8x128xf32>
    %cst_5 = arith.constant 1.000000e+00 : f32
    %8 = vector.broadcast %cst_5 : f32 to vector<8x128xf32>
    %9 = arith.addf %8, %7 : vector<8x128xf32>
    %10 = arith.divf %8, %9 : vector<8x128xf32>
    %11 = arith.truncf %10 : vector<8x128xf32> to vector<8x128xbf16>
    %c0_6 = arith.constant 0 : index
    %c0_7 = arith.constant 0 : index
    %12 = vector.load %arg4[%c0_6, %c0_7] : memref<128x128xbf16, #tpu.memory_space<vmem>>, vector<128x128xbf16>
    %cst_8 = arith.constant dense<0.000000e+00> : vector<8x128xf32>
    %13 = tpu.matmul %11, %12, %cst_8 {dimension_numbers = #tpu.dot_dimension_numbers<[1], [0], [0], [1], [0, 0, 1, 1], [], []>} : vector<8x128xbf16>, vector<128x128xbf16>, vector<8x128xf32> -> vector<8x128xf32>
    %c0_9 = arith.constant 0 : index
    %c0_10 = arith.constant 0 : index
    %14 = vector.load %arg5[%c0_9, %c0_10] : memref<1x128xf32, #tpu.memory_space<vmem>>, vector<1x128xf32>
    %15 = vector.broadcast %14 : vector<1x128xf32> to vector<8x128xf32>
    %16 = arith.addf %13, %15 : vector<8x128xf32>
    %17 = arith.negf %16 : vector<8x128xf32>
    %18 = math.exp %17 : vector<8x128xf32>
    %cst_11 = arith.constant 1.000000e+00 : f32
    %19 = vector.broadcast %cst_11 : f32 to vector<8x128xf32>
    %20 = arith.addf %19, %18 : vector<8x128xf32>
    %21 = arith.divf %19, %20 : vector<8x128xf32>
    %22 = arith.truncf %21 : vector<8x128xf32> to vector<8x128xbf16>
    %c0_12 = arith.constant 0 : index
    %c0_13 = arith.constant 0 : index
    %23 = vector.load %arg6[%c0_12, %c0_13] : memref<128x128xbf16, #tpu.memory_space<vmem>>, vector<128x128xbf16>
    %cst_14 = arith.constant dense<0.000000e+00> : vector<8x128xf32>
    %24 = tpu.matmul %22, %23, %cst_14 {dimension_numbers = #tpu.dot_dimension_numbers<[1], [0], [0], [1], [0, 0, 1, 1], [], []>} : vector<8x128xbf16>, vector<128x128xbf16>, vector<8x128xf32> -> vector<8x128xf32>
    %c0_15 = arith.constant 0 : index
    %c0_16 = arith.constant 0 : index
    %25 = vector.load %arg7[%c0_15, %c0_16] : memref<1x128xf32, #tpu.memory_space<vmem>>, vector<1x128xf32>
    %26 = vector.broadcast %25 : vector<1x128xf32> to vector<8x128xf32>
    %27 = arith.addf %24, %26 : vector<8x128xf32>
    %28 = arith.negf %27 : vector<8x128xf32>
    %29 = math.exp %28 : vector<8x128xf32>
    %cst_17 = arith.constant 1.000000e+00 : f32
    %30 = vector.broadcast %cst_17 : f32 to vector<8x128xf32>
    %31 = arith.addf %30, %29 : vector<8x128xf32>
    %32 = arith.divf %30, %31 : vector<8x128xf32>
    %33 = arith.truncf %32 : vector<8x128xf32> to vector<8x128xbf16>
    %c0_18 = arith.constant 0 : index
    %c0_19 = arith.constant 0 : index
    %34 = vector.load %arg8[%c0_18, %c0_19] : memref<128x128xbf16, #tpu.memory_space<vmem>>, vector<128x128xbf16>
    %cst_20 = arith.constant dense<0.000000e+00> : vector<8x128xf32>
    %35 = tpu.matmul %33, %34, %cst_20 {dimension_numbers = #tpu.dot_dimension_numbers<[1], [0], [0], [1], [0, 0, 1, 1], [], []>} : vector<8x128xbf16>, vector<128x128xbf16>, vector<8x128xf32> -> vector<8x128xf32>
    %c0_21 = arith.constant 0 : index
    %c0_22 = arith.constant 0 : index
    %36 = vector.load %arg9[%c0_21, %c0_22] : memref<1x128xf32, #tpu.memory_space<vmem>>, vector<1x128xf32>
    %37 = vector.broadcast %36 : vector<1x128xf32> to vector<8x128xf32>
    %38 = arith.addf %35, %37 : vector<8x128xf32>
    %c0_23 = arith.constant 0 : index
    %c0_24 = arith.constant 0 : index
    %39 = vector.load %arg10[%c0_23, %c0_24] : memref<8x128xf32, #tpu.memory_space<vmem>>, vector<8x128xf32>
    tpu.vector_store %arg10[%c0_23, %c0_24], %38 {strides = array<i32>} : memref<8x128xf32, #tpu.memory_space<vmem>>, vector<8x128xf32>,
    return
  }
  func.func @transform_0(%arg0: i32) -> (i32, i32) {
    %c0_i32 = arith.constant 0 : i32
    %c0_i32_0 = arith.constant 0 : i32
    return %arg0, %c0_i32 : i32, i32
  }
  func.func @transform_1(%arg0: i32) -> (i32, i32) {
    %c0_i32 = arith.constant 0 : i32
    %c0_i32_0 = arith.constant 0 : i32
    %c0_i32_1 = arith.constant 0 : i32
    return %c0_i32, %c0_i32_0 : i32, i32
  }
  func.func @transform_2(%arg0: i32) -> (i32, i32) {
    %c0_i32 = arith.constant 0 : i32
    %c0_i32_0 = arith.constant 0 : i32
    %c0_i32_1 = arith.constant 0 : i32
    return %c0_i32, %c0_i32_0 : i32, i32
  }
  func.func @transform_3(%arg0: i32) -> (i32, i32) {
    %c0_i32 = arith.constant 0 : i32
    %c0_i32_0 = arith.constant 0 : i32
    %c0_i32_1 = arith.constant 0 : i32
    return %c0_i32, %c0_i32_0 : i32, i32
  }
  func.func @transform_4(%arg0: i32) -> (i32, i32) {
    %c0_i32 = arith.constant 0 : i32
    %c0_i32_0 = arith.constant 0 : i32
    %c0_i32_1 = arith.constant 0 : i32
    return %c0_i32, %c0_i32_0 : i32, i32
  }
  func.func @transform_5(%arg0: i32) -> (i32, i32) {
    %c0_i32 = arith.constant 0 : i32
    %c0_i32_0 = arith.constant 0 : i32
    %c0_i32_1 = arith.constant 0 : i32
    return %c0_i32, %c0_i32_0 : i32, i32
  }
  func.func @transform_6(%arg0: i32) -> (i32, i32) {
    %c0_i32 = arith.constant 0 : i32
    %c0_i32_0 = arith.constant 0 : i32
    %c0_i32_1 = arith.constant 0 : i32
    return %c0_i32, %c0_i32_0 : i32, i32
  }
  func.func @transform_7(%arg0: i32) -> (i32, i32) {
    %c0_i32 = arith.constant 0 : i32
    %c0_i32_0 = arith.constant 0 : i32
    %c0_i32_1 = arith.constant 0 : i32
    return %c0_i32, %c0_i32_0 : i32, i32
  }
  func.func @transform_8(%arg0: i32) -> (i32, i32) {
    %c0_i32 = arith.constant 0 : i32
    %c0_i32_0 = arith.constant 0 : i32
    %c0_i32_1 = arith.constant 0 : i32
    return %c0_i32, %c0_i32_0 : i32, i32
  }
  func.func @transform_9(%arg0: i32) -> (i32, i32) {
    %c0_i32 = arith.constant 0 : i32
    %c0_i32_0 = arith.constant 0 : i32
    return %arg0, %c0_i32 : i32, i32
  }
}

</mosaic_0001>

<llo_original>
// kernel: tpu_custom_call.1
$region0: #{tpu_custom_call.1}
  #allocation0 [shape = 'u32[]', space=smem, size = 0x4, offset = 0x4, fixed_abs, tag = 'smem constant byte address 0x4 - core index']
  #allocation1 [shape = 'u32[72,128]{1,0:T(1,128)}', space=vmem, size = 0x9000, scoped, tag = 'internal scratch']
  %s0 = inlined_call_operand.hbm [shape: bf16[8,3072], index: 0, kind: input, shape index: {}]
  %s1 = inlined_call_operand.hbm [shape: bf16[3072,128], index: 1, kind: input, shape index: {}]
  %s2 = inlined_call_operand.vmem [shape: f32[1,128], index: 2, kind: input, shape index: {}]
  %s3 = inlined_call_operand.hbm [shape: bf16[128,128], index: 3, kind: input, shape index: {}]
  %s4 = inlined_call_operand.vmem [shape: f32[1,128], index: 4, kind: input, shape index: {}]
  %s5 = inlined_call_operand.hbm [shape: bf16[128,128], index: 5, kind: input, shape index: {}]
  %s6 = inlined_call_operand.vmem [shape: f32[1,128], index: 6, kind: input, shape index: {}]
  %s7 = inlined_call_operand.hbm [shape: bf16[128,128], index: 7, kind: input, shape index: {}]
  %s8 = inlined_call_operand.vmem [shape: f32[1,128], index: 8, kind: input, shape index: {}]
  %s9 = inlined_call_operand.hbm [shape: f32[8,128], index: 9, kind: output, shape index: {}]
  %s10 = sld [smem:[#allocation0]]
  $region66: #{tpu_custom_call.1} parent=0
    _
  %s12 = ssub.s32 1, %s10
  %s13 = scalar_select 0, %s12, %s10
  $region1: #{tpu_custom_call.1} parent=0
    #allocation2 [shape = 'u8[49152]{0}', space=vmem, size = 0xc000, scoped, tag = 'input window, operand 0, single buffered']
    #allocation3 [shape = 's32[1]{0}', space=sflag, size = 0x4, scoped, tag = 'scoped memory for tpu_custom_call.1']
    #allocation4 [shape = 's32[1]{0}', space=sflag, size = 0x4, scoped, tag = 'scoped memory for tpu_custom_call.1']
    #allocation5 [shape = 'u8[786432]{0}', space=vmem, size = 0xc0000, scoped, tag = 'input window, operand 1, single buffered']
    #allocation6 [shape = 's32[1]{0}', space=sflag, size = 0x4, scoped, tag = 'scoped memory for tpu_custom_call.1']
    #allocation7 [shape = 'u8[32768]{0}', space=vmem, size = 0x8000, scoped, tag = 'input window, operand 3, single buffered']
    #allocation8 [shape = 'u8[32768]{0}', space=vmem, size = 0x8000, scoped, tag = 'input window, operand 5, single buffered']
    #allocation9 [shape = 's32[1]{0}', space=sflag, size = 0x4, scoped, tag = 'scoped memory for tpu_custom_call.1']
    #allocation10 [shape = 'u8[32768]{0}', space=vmem, size = 0x8000, scoped, tag = 'input window, operand 7, single buffered']
    #allocation11 [shape = 'u8[4096]{0}', space=vmem, size = 0x1000, scoped, tag = 'output window, operand 0, single buffered']
    %14 = vsyncpa [#allocation3], 0
    %15 = vsyncpa [#allocation6], 0
    %16 = vsyncpa [#allocation9], 0
    %17 = vsyncpa [#allocation4], 0
    // Predicated region
    $region2: #{tpu_custom_call.1} parent=1 // pred_check
      _
    $region3: #{tpu_custom_call.1} parent=1 // pred_check_branch
      %19 = sbr.rel (0) target = $region5
    $region4: #{tpu_custom_call.1} parent=1 // pred_region
      %21 = vsyncadd [#allocation3], 0
      %s23 = sshll.u32 %s0, 4
      %s24 = int_to_ptr.hbm [resolvable:$true] %s23
      %s25 = sshll.u32 [#allocation2], 4
      %s26 = int_to_ptr.vmem [resolvable:$true] %s25
      %28 = dma.hbm_to_vmem [thread:$0]  %s24, 1536, %s26, [#allocation3]
    $region5: #{tpu_custom_call.1} parent=1 // pred_fallthru
      _
    // Predicated region
    $region6: #{tpu_custom_call.1} parent=1 // pred_check
      _
    $region7: #{tpu_custom_call.1} parent=1 // pred_check_branch
      %30 = sbr.rel (0) target = $region9
    $region8: #{tpu_custom_call.1} parent=1 // pred_region
      %32 = vsyncadd [#allocation6], 0
      %s33 = sshll.u32 %s1, 4
      %s34 = int_to_ptr.hbm [resolvable:$true] %s33
      %s35 = sshll.u32 [#allocation5], 4
      %s36 = int_to_ptr.vmem [resolvable:$true] %s35
      %41 = dma.hbm_to_vmem [thread:$0]  %s34, 24576, %s36, [#allocation6], 64, 64, 4
    $region9: #{tpu_custom_call.1} parent=1 // pred_fallthru
      _
    // Predicated region
    $region10: #{tpu_custom_call.1} parent=1 // pred_check
      _
    $region11: #{tpu_custom_call.1} parent=1 // pred_check_branch
      %43 = sbr.rel (0) target = $region13
    $region12: #{tpu_custom_call.1} parent=1 // pred_region
      _
    $region13: #{tpu_custom_call.1} parent=1 // pred_fallthru
      _
    // Predicated region
    $region14: #{tpu_custom_call.1} parent=1 // pred_check
      _
    $region15: #{tpu_custom_call.1} parent=1 // pred_check_branch
      %45 = sbr.rel (0) target = $region17
    $region16: #{tpu_custom_call.1} parent=1 // pred_region
      %47 = vsyncadd [#allocation6], 0
      %s48 = sshll.u32 %s3, 4
      %s49 = int_to_ptr.hbm [resolvable:$true] %s48
      %s50 = sshll.u32 [#allocation7], 4
      %s51 = int_to_ptr.vmem [resolvable:$true] %s50
      %56 = dma.hbm_to_vmem [thread:$0]  %s49, 1024, %s51, [#allocation6], 64, 64, 4
    $region17: #{tpu_custom_call.1} parent=1 // pred_fallthru
      _
    // Predicated region
    $region18: #{tpu_custom_call.1} parent=1 // pred_check
      _
    $region19: #{tpu_custom_call.1} parent=1 // pred_check_branch
      %58 = sbr.rel (0) target = $region21
    $region20: #{tpu_custom_call.1} parent=1 // pred_region
      _
    $region21: #{tpu_custom_call.1} parent=1 // pred_fallthru
      _
    // Predicated region
    $region22: #{tpu_custom_call.1} parent=1 // pred_check
      _
    $region23: #{tpu_custom_call.1} parent=1 // pred_check_branch
      %60 = sbr.rel (0) target = $region25
    $region24: #{tpu_custom_call.1} parent=1 // pred_region
      %62 = vsyncadd [#allocation9], 0
      %s63 = sshll.u32 %s5, 4
      %s64 = int_to_ptr.hbm [resolvable:$true] %s63
      %s65 = sshll.u32 [#allocation8], 4
      %s66 = int_to_ptr.vmem [resolvable:$true] %s65
      %71 = dma.hbm_to_vmem [thread:$0]  %s64, 1024, %s66, [#allocation9], 64, 64, 4
    $region25: #{tpu_custom_call.1} parent=1 // pred_fallthru
      _
    // Predicated region
    $region26: #{tpu_custom_call.1} parent=1 // pred_check
      _
    $region27: #{tpu_custom_call.1} parent=1 // pred_check_branch
      %73 = sbr.rel (0) target = $region29
    $region28: #{tpu_custom_call.1} parent=1 // pred_region
      _
    $region29: #{tpu_custom_call.1} parent=1 // pred_fallthru
      _
    // Predicated region
    $region30: #{tpu_custom_call.1} parent=1 // pred_check
      _
    $region31: #{tpu_custom_call.1} parent=1 // pred_check_branch
      %75 = sbr.rel (0) target = $region33
    $region32: #{tpu_custom_call.1} parent=1 // pred_region
      %77 = vsyncadd [#allocation9], 0
      %s78 = sshll.u32 %s7, 4
      %s79 = int_to_ptr.hbm [resolvable:$true] %s78
      %s80 = sshll.u32 [#allocation10], 4
      %s81 = int_to_ptr.vmem [resolvable:$true] %s80
      %86 = dma.hbm_to_vmem [thread:$0]  %s79, 1024, %s81, [#allocation9], 64, 64, 4
    $region33: #{tpu_custom_call.1} parent=1 // pred_fallthru
      _
    // Predicated region
    $region34: #{tpu_custom_call.1} parent=1 // pred_check
      _
    $region35: #{tpu_custom_call.1} parent=1 // pred_check_branch
      %88 = sbr.rel (0) target = $region37
    $region36: #{tpu_custom_call.1} parent=1 // pred_region
      _
    $region37: #{tpu_custom_call.1} parent=1 // pred_fallthru
      _
    // Predicated region
    $region38: #{tpu_custom_call.1} parent=1 // pred_check
      _
    $region39: #{tpu_custom_call.1} parent=1 // pred_check_branch
      %90 = sbr.rel (0) target = $region41
    $region40: #{tpu_custom_call.1} parent=1 // pred_region
      %92 = dma.done [#allocation3], 1536
    $region41: #{tpu_custom_call.1} parent=1 // pred_fallthru
      _
    // Predicated region
    $region42: #{tpu_custom_call.1} parent=1 // pred_check
      _
    $region43: #{tpu_custom_call.1} parent=1 // pred_check_branch
      %94 = sbr.rel (0) target = $region45
    $region44: #{tpu_custom_call.1} parent=1 // pred_region
      %96 = dma.done [#allocation6], 24576
    $region45: #{tpu_custom_call.1} parent=1 // pred_fallthru
      _
    // Predicated region
    $region46: #{tpu_custom_call.1} parent=1 // pred_check
      _
    $region47: #{tpu_custom_call.1} parent=1 // pred_check_branch
      %98 = sbr.rel (0) target = $region49
    $region48: #{tpu_custom_call.1} parent=1 // pred_region
      %100 = dma.done [#allocation6], 1024
    $region49: #{tpu_custom_call.1} parent=1 // pred_fallthru
      _
    // Predicated region
    $region50: #{tpu_custom_call.1} parent=1 // pred_check
      _
    $region51: #{tpu_custom_call.1} parent=1 // pred_check_branch
      %102 = sbr.rel (0) target = $region53
    $region52: #{tpu_custom_call.1} parent=1 // pred_region
      %104 = dma.done [#allocation9], 1024
    $region53: #{tpu_custom_call.1} parent=1 // pred_fallthru
      _
    // Predicated region
    $region54: #{tpu_custom_call.1} parent=1 // pred_check
      _
    $region55: #{tpu_custom_call.1} parent=1 // pred_check_branch
      %106 = sbr.rel (0) target = $region57
    $region56: #{tpu_custom_call.1} parent=1 // pred_region
      %108 = dma.done [#allocation9], 1024
    $region57: #{tpu_custom_call.1} parent=1 // pred_fallthru
      _
    %v109 = vld [vmem:[#allocation2] sm:$0xff]
    %v110 = vld [vmem:[#allocation2 + $0x8] sm:$0xff]
    %v111 = vld [vmem:[#allocation2 + $0x10] sm:$0xff]
    %v112 = vld [vmem:[#allocation2 + $0x18] sm:$0xff]
    %v113 = vld [vmem:[#allocation2 + $0x20] sm:$0xff]
    %v114 = vld [vmem:[#allocation2 + $0x28] sm:$0xff]
    %v115 = vld [vmem:[#allocation2 + $0x30] sm:$0xff]
    %v116 = vld [vmem:[#allocation2 + $0x38] sm:$0xff]
    %v117 = vld [vmem:[#allocation2 + $0x40] sm:$0xff]
    %v118 = vld [vmem:[#allocation2 + $0x48] sm:$0xff]
    %v119 = vld [vmem:[#allocation2 + $0x50] sm:$0xff]
    %v120 = vld [vmem:[#allocation2 + $0x58] sm:$0xff]
    %v121 = vld [vmem:[#allocation5] sm:$0xf]
    %v122 = vld [vmem:[#allocation5 + $0x4] sm:$0xf]
    %v123 = vld [vmem:[#allocation5 + $0x8] sm:$0xf]
    %v124 = vld [vmem:[#allocation5 + $0xc] sm:$0xf]
    %v125 = vld [vmem:[#allocation5 + $0x10] sm:$0xf]
    %v126 = vld [vmem:[#allocation5 + $0x14] sm:$0xf]
    %v127 = vld [vmem:[#allocation5 + $0x18] sm:$0xf]
    %v128 = vld [vmem:[#allocation5 + $0x1c] sm:$0xf]
    %v129 = vld [vmem:[#allocation5 + $0x20] sm:$0xf]
    %v130 = vld [vmem:[#allocation5 + $0x24] sm:$0xf]
    %v131 = vld [vmem:[#allocation5 + $0x28] sm:$0xf]
    %v132 = vld [vmem:[#allocation5 + $0x2c] sm:$0xf]
    %v133 = vld [vmem:[#allocation5 + $0x30] sm:$0xf]
    %v134 = vld [vmem:[#allocation5 + $0x34] sm:$0xf]
    %v135 = vld [vmem:[#allocation5 + $0x38] sm:$0xf]
    %v136 = vld [vmem:[#allocation5 + $0x3c] sm:$0xf]
    %v137 = vld [vmem:[#allocation5 + $0x40] sm:$0xf]
    %v138 = vld [vmem:[#allocation5 + $0x44] sm:$0xf]
    %v139 = vld [vmem:[#allocation5 + $0x48] sm:$0xf]
    %v140 = vld [vmem:[#allocation5 + $0x4c] sm:$0xf]
    %v141 = vld [vmem:[#allocation5 + $0x50] sm:$0xf]
    %v142 = vld [vmem:[#allocation5 + $0x54] sm:$0xf]
    %v143 = vld [vmem:[#allocation5 + $0x58] sm:$0xf]
    %v144 = vld [vmem:[#allocation5 + $0x5c] sm:$0xf]
    %v145 = vld [vmem:[#allocation5 + $0x60] sm:$0xf]
    %v146 = vld [vmem:[#allocation5 + $0x64] sm:$0xf]
    %v147 = vld [vmem:[#allocation5 + $0x68] sm:$0xf]
    %v148 = vld [vmem:[#allocation5 + $0x6c] sm:$0xf]
    %v149 = vld [vmem:[#allocation5 + $0x70] sm:$0xf]
    %v150 = vld [vmem:[#allocation5 + $0x74] sm:$0xf]
    %v151 = vld [vmem:[#allocation5 + $0x78] sm:$0xf]
    %v152 = vld [vmem:[#allocation5 + $0x7c] sm:$0xf]
    %v153 = vld [vmem:[#allocation5 + $0x80] sm:$0xf]
    %v154 = vld [vmem:[#allocation5 + $0x84] sm:$0xf]
    %v155 = vld [vmem:[#allocation5 + $0x88] sm:$0xf]
    %v156 = vld [vmem:[#allocation5 + $0x8c] sm:$0xf]
    %v157 = vld [vmem:[#allocation5 + $0x90] sm:$0xf]
    %v158 = vld [vmem:[#allocation5 + $0x94] sm:$0xf]
    %v159 = vld [vmem:[#allocation5 + $0x98] sm:$0xf]
    %v160 = vld [vmem:[#allocation5 + $0x9c] sm:$0xf]
    %v161 = vld [vmem:[#allocation5 + $0xa0] sm:$0xf]
    %v162 = vld [vmem:[#allocation5 + $0xa4] sm:$0xf]
    %v163 = vld [vmem:[#allocation5 + $0xa8] sm:$0xf]
    %v164 = vld [vmem:[#allocation5 + $0xac] sm:$0xf]
    %v165 = vld [vmem:[#allocation5 + $0xb0] sm:$0xf]
    %v166 = vld [vmem:[#allocation5 + $0xb4] sm:$0xf]
    %v167 = vld [vmem:[#allocation5 + $0xb8] sm:$0xf]
    %v168 = vld [vmem:[#allocation5 + $0xbc] sm:$0xf]
    %v169 = vld [vmem:[#allocation5 + $0xc0] sm:$0xf]
    %v170 = vld [vmem:[#allocation5 + $0xc4] sm:$0xf]
    %v171 = vld [vmem:[#allocation5 + $0xc8] sm:$0xf]
    %v172 = vld [vmem:[#allocation5 + $0xcc] sm:$0xf]
    %v173 = vld [vmem:[#allocation5 + $0xd0] sm:$0xf]
    %v174 = vld [vmem:[#allocation5 + $0xd4] sm:$0xf]
    %v175 = vld [vmem:[#allocation5 + $0xd8] sm:$0xf]
    %v176 = vld [vmem:[#allocation5 + $0xdc] sm:$0xf]
    %v177 = vld [vmem:[#allocation5 + $0xe0] sm:$0xf]
    %v178 = vld [vmem:[#allocation5 + $0xe4] sm:$0xf]
    %v179 = vld [vmem:[#allocation5 + $0xe8] sm:$0xf]
    %v180 = vld [vmem:[#allocation5 + $0xec] sm:$0xf]
    %v181 = vld [vmem:[#allocation5 + $0xf0] sm:$0xf]
    %v182 = vld [vmem:[#allocation5 + $0xf4] sm:$0xf]
    %v183 = vld [vmem:[#allocation5 + $0xf8] sm:$0xf]
    %v184 = vld [vmem:[#allocation5 + $0xfc] sm:$0xf]
    %v185 = vld [vmem:[#allocation5 + $0x100] sm:$0xf]
    %v186 = vld [vmem:[#allocation5 + $0x104] sm:$0xf]
    %v187 = vld [vmem:[#allocation5 + $0x108] sm:$0xf]
    %v188 = vld [vmem:[#allocation5 + $0x10c] sm:$0xf]
    %v189 = vld [vmem:[#allocation5 + $0x110] sm:$0xf]
    %v190 = vld [vmem:[#allocation5 + $0x114] sm:$0xf]
    %v191 = vld [vmem:[#allocation5 + $0x118] sm:$0xf]
    %v192 = vld [vmem:[#allocation5 + $0x11c] sm:$0xf]
    %v193 = vld [vmem:[#allocation5 + $0x120] sm:$0xf]
    %v194 = vld [vmem:[#allocation5 + $0x124] sm:$0xf]
    %v195 = vld [vmem:[#allocation5 + $0x128] sm:$0xf]
    %v196 = vld [vmem:[#allocation5 + $0x12c] sm:$0xf]
    %v197 = vld [vmem:[#allocation5 + $0x130] sm:$0xf]
    %v198 = vld [vmem:[#allocation5 + $0x134] sm:$0xf]
    %v199 = vld [vmem:[#allocation5 + $0x138] sm:$0xf]
    %v200 = vld [vmem:[#allocation5 + $0x13c] sm:$0xf]
    %v201 = vld [vmem:[#allocation5 + $0x140] sm:$0xf]
    %v202 = vld [vmem:[#allocation5 + $0x144] sm:$0xf]
    %v203 = vld [vmem:[#allocation5 + $0x148] sm:$0xf]
    %v204 = vld [vmem:[#allocation5 + $0x14c] sm:$0xf]
    %v205 = vld [vmem:[#allocation5 + $0x150] sm:$0xf]
    %v206 = vld [vmem:[#allocation5 + $0x154] sm:$0xf]
    %v207 = vld [vmem:[#allocation5 + $0x158] sm:$0xf]
    %v208 = vld [vmem:[#allocation5 + $0x15c] sm:$0xf]
    %v209 = vld [vmem:[#allocation5 + $0x160] sm:$0xf]
    %v210 = vld [vmem:[#allocation5 + $0x164] sm:$0xf]
    %v211 = vld [vmem:[#allocation5 + $0x168] sm:$0xf]
    %v212 = vld [vmem:[#allocation5 + $0x16c] sm:$0xf]
    %v213 = vld [vmem:[#allocation5 + $0x170] sm:$0xf]
    %v214 = vld [vmem:[#allocation5 + $0x174] sm:$0xf]
    %v215 = vld [vmem:[#allocation5 + $0x178] sm:$0xf]
    %v216 = vld [vmem:[#allocation5 + $0x17c] sm:$0xf]
    %v217 = vld [vmem:[#allocation5 + $0x180] sm:$0xf]
    %v218 = vld [vmem:[#allocation5 + $0x184] sm:$0xf]
    %v219 = vld [vmem:[#allocation5 + $0x188] sm:$0xf]
    %v220 = vld [vmem:[#allocation5 + $0x18c] sm:$0xf]
    %v221 = vld [vmem:[#allocation5 + $0x190] sm:$0xf]
    %v222 = vld [vmem:[#allocation5 + $0x194] sm:$0xf]
    %v223 = vld [vmem:[#allocation5 + $0x198] sm:$0xf]
    %v224 = vld [vmem:[#allocation5 + $0x19c] sm:$0xf]
    %v225 = vld [vmem:[#allocation5 + $0x1a0] sm:$0xf]
    %v226 = vld [vmem:[#allocation5 + $0x1a4] sm:$0xf]
    %v227 = vld [vmem:[#allocation5 + $0x1a8] sm:$0xf]
    %v228 = vld [vmem:[#allocation5 + $0x1ac] sm:$0xf]
    %v229 = vld [vmem:[#allocation5 + $0x1b0] sm:$0xf]
    %v230 = vld [vmem:[#allocation5 + $0x1b4] sm:$0xf]
    %v231 = vld [vmem:[#allocation5 + $0x1b8] sm:$0xf]
    %v232 = vld [vmem:[#allocation5 + $0x1bc] sm:$0xf]
    %v233 = vld [vmem:[#allocation5 + $0x1c0] sm:$0xf]
    %v234 = vld [vmem:[#allocation5 + $0x1c4] sm:$0xf]
    %v235 = vld [vmem:[#allocation5 + $0x1c8] sm:$0xf]
    %v236 = vld [vmem:[#allocation5 + $0x1cc] sm:$0xf]
    %v237 = vld [vmem:[#allocation5 + $0x1d0] sm:$0xf]
    %v238 = vld [vmem:[#allocation5 + $0x1d4] sm:$0xf]
    %v239 = vld [vmem:[#allocation5 + $0x1d8] sm:$0xf]
    %v240 = vld [vmem:[#allocation5 + $0x1dc] sm:$0xf]
    %v241 = vld [vmem:[#allocation5 + $0x1e0] sm:$0xf]
    %v242 = vld [vmem:[#allocation5 + $0x1e4] sm:$0xf]
    %v243 = vld [vmem:[#allocation5 + $0x1e8] sm:$0xf]
    %v244 = vld [vmem:[#allocation5 + $0x1ec] sm:$0xf]
    %v245 = vld [vmem:[#allocation5 + $0x1f0] sm:$0xf]
    %v246 = vld [vmem:[#allocation5 + $0x1f4] sm:$0xf]
    %v247 = vld [vmem:[#allocation5 + $0x1f8] sm:$0xf]
    %v248 = vld [vmem:[#allocation5 + $0x1fc] sm:$0xf]
    %v249 = vld [vmem:[#allocation5 + $0x200] sm:$0xf]
    %v250 = vld [vmem:[#allocation5 + $0x204] sm:$0xf]
    %v251 = vld [vmem:[#allocation5 + $0x208] sm:$0xf]
    %v252 = vld [vmem:[#allocation5 + $0x20c] sm:$0xf]
    %v253 = vld [vmem:[#allocation5 + $0x210] sm:$0xf]
    %v254 = vld [vmem:[#allocation5 + $0x214] sm:$0xf]
    %v255 = vld [vmem:[#allocation5 + $0x218] sm:$0xf]
    %v256 = vld [vmem:[#allocation5 + $0x21c] sm:$0xf]
    %v257 = vld [vmem:[#allocation5 + $0x220] sm:$0xf]
    %v258 = vld [vmem:[#allocation5 + $0x224] sm:$0xf]
    %v259 = vld [vmem:[#allocation5 + $0x228] sm:$0xf]
    %v260 = vld [vmem:[#allocation5 + $0x22c] sm:$0xf]
    %v261 = vld [vmem:[#allocation5 + $0x230] sm:$0xf]
    %v262 = vld [vmem:[#allocation5 + $0x234] sm:$0xf]
    %v263 = vld [vmem:[#allocation5 + $0x238] sm:$0xf]
    %v264 = vld [vmem:[#allocation5 + $0x23c] sm:$0xf]
    %v265 = vld [vmem:[#allocation5 + $0x240] sm:$0xf]
    %v266 = vld [vmem:[#allocation5 + $0x244] sm:$0xf]
    %v267 = vld [vmem:[#allocation5 + $0x248] sm:$0xf]
    %v268 = vld [vmem:[#allocation5 + $0x24c] sm:$0xf]
    %v269 = vld [vmem:[#allocation5 + $0x250] sm:$0xf]
    %v270 = vld [vmem:[#allocation5 + $0x254] sm:$0xf]
    %v271 = vld [vmem:[#allocation5 + $0x258] sm:$0xf]
    %v272 = vld [vmem:[#allocation5 + $0x25c] sm:$0xf]
    %v273 = vld [vmem:[#allocation5 + $0x260] sm:$0xf]
    %v274 = vld [vmem:[#allocation5 + $0x264] sm:$0xf]
    %v275 = vld [vmem:[#allocation5 + $0x268] sm:$0xf]
    %v276 = vld [vmem:[#allocation5 + $0x26c] sm:$0xf]
    %v277 = vld [vmem:[#allocation5 + $0x270] sm:$0xf]
    %v278 = vld [vmem:[#allocation5 + $0x274] sm:$0xf]
    %v279 = vld [vmem:[#allocation5 + $0x278] sm:$0xf]
    %v280 = vld [vmem:[#allocation5 + $0x27c] sm:$0xf]
    %v281 = vld [vmem:[#allocation5 + $0x280] sm:$0xf]
    %v282 = vld [vmem:[#allocation5 + $0x284] sm:$0xf]
    %v283 = vld [vmem:[#allocation5 + $0x288] sm:$0xf]
    %v284 = vld [vmem:[#allocation5 + $0x28c] sm:$0xf]
    %v285 = vld [vmem:[#allocation5 + $0x290] sm:$0xf]
    %v286 = vld [vmem:[#allocation5 + $0x294] sm:$0xf]
    %v287 = vld [vmem:[#allocation5 + $0x298] sm:$0xf]
    %v288 = vld [vmem:[#allocation5 + $0x29c] sm:$0xf]
    %v289 = vld [vmem:[#allocation5 + $0x2a0] sm:$0xf]
    %v290 = vld [vmem:[#allocation5 + $0x2a4] sm:$0xf]
    %v291 = vld [vmem:[#allocation5 + $0x2a8] sm:$0xf]
    %v292 = vld [vmem:[#allocation5 + $0x2ac] sm:$0xf]
    %v293 = vld [vmem:[#allocation5 + $0x2b0] sm:$0xf]
    %v294 = vld [vmem:[#allocation5 + $0x2b4] sm:$0xf]
    %v295 = vld [vmem:[#allocation5 + $0x2b8] sm:$0xf]
    %v296 = vld [vmem:[#allocation5 + $0x2bc] sm:$0xf]
    %v297 = vld [vmem:[#allocation5 + $0x2c0] sm:$0xf]
    %v298 = vld [vmem:[#allocation5 + $0x2c4] sm:$0xf]
    %v299 = vld [vmem:[#allocation5 + $0x2c8] sm:$0xf]
    %v300 = vld [vmem:[#allocation5 + $0x2cc] sm:$0xf]
    %v301 = vld [vmem:[#allocation5 + $0x2d0] sm:$0xf]
    %v302 = vld [vmem:[#allocation5 + $0x2d4] sm:$0xf]
    %v303 = vld [vmem:[#allocation5 + $0x2d8] sm:$0xf]
    %v304 = vld [vmem:[#allocation5 + $0x2dc] sm:$0xf]
    %v305 = vld [vmem:[#allocation5 + $0x2e0] sm:$0xf]
    %v306 = vld [vmem:[#allocation5 + $0x2e4] sm:$0xf]
    %v307 = vld [vmem:[#allocation5 + $0x2e8] sm:$0xf]
    %v308 = vld [vmem:[#allocation5 + $0x2ec] sm:$0xf]
    %v309 = vld [vmem:[#allocation5 + $0x2f0] sm:$0xf]
    %v310 = vld [vmem:[#allocation5 + $0x2f4] sm:$0xf]
    %v311 = vld [vmem:[#allocation5 + $0x2f8] sm:$0xf]
    %v312 = vld [vmem:[#allocation5 + $0x2fc] sm:$0xf]
    %v313 = vld [vmem:[#allocation5 + $0x300] sm:$0xf]
    %v314 = vld [vmem:[#allocation5 + $0x304] sm:$0xf]
    %v315 = vld [vmem:[#allocation5 + $0x308] sm:$0xf]
    %v316 = vld [vmem:[#allocation5 + $0x30c] sm:$0xf]
    %v317 = vld [vmem:[#allocation5 + $0x310] sm:$0xf]
    %v318 = vld [vmem:[#allocation5 + $0x314] sm:$0xf]
    %v319 = vld [vmem:[#allocation5 + $0x318] sm:$0xf]
    %v320 = vld [vmem:[#allocation5 + $0x31c] sm:$0xf]
    %v321 = vld [vmem:[#allocation5 + $0x320] sm:$0xf]
    %v322 = vld [vmem:[#allocation5 + $0x324] sm:$0xf]
    %v323 = vld [vmem:[#allocation5 + $0x328] sm:$0xf]
    %v324 = vld [vmem:[#allocation5 + $0x32c] sm:$0xf]
    %v325 = vld [vmem:[#allocation5 + $0x330] sm:$0xf]
    %v326 = vld [vmem:[#allocation5 + $0x334] sm:$0xf]
    %v327 = vld [vmem:[#allocation5 + $0x338] sm:$0xf]
    %v328 = vld [vmem:[#allocation5 + $0x33c] sm:$0xf]
    %v329 = vld [vmem:[#allocation5 + $0x340] sm:$0xf]
    %v330 = vld [vmem:[#allocation5 + $0x344] sm:$0xf]
    %v331 = vld [vmem:[#allocation5 + $0x348] sm:$0xf]
    %v332 = vld [vmem:[#allocation5 + $0x34c] sm:$0xf]
    %v333 = vld [vmem:[#allocation5 + $0x350] sm:$0xf]
    %v334 = vld [vmem:[#allocation5 + $0x354] sm:$0xf]
    %v335 = vld [vmem:[#allocation5 + $0x358] sm:$0xf]
    %v336 = vld [vmem:[#allocation5 + $0x35c] sm:$0xf]
    %v337 = vld [vmem:[#allocation5 + $0x360] sm:$0xf]
    %v338 = vld [vmem:[#allocation5 + $0x364] sm:$0xf]
    %v339 = vld [vmem:[#allocation5 + $0x368] sm:$0xf]
    %v340 = vld [vmem:[#allocation5 + $0x36c] sm:$0xf]
    %v341 = vld [vmem:[#allocation5 + $0x370] sm:$0xf]
    %v342 = vld [vmem:[#allocation5 + $0x374] sm:$0xf]
    %v343 = vld [vmem:[#allocation5 + $0x378] sm:$0xf]
    %v344 = vld [vmem:[#allocation5 + $0x37c] sm:$0xf]
    %v345 = vld [vmem:[#allocation5 + $0x380] sm:$0xf]
    %v346 = vld [vmem:[#allocation5 + $0x384] sm:$0xf]
    %v347 = vld [vmem:[#allocation5 + $0x388] sm:$0xf]
    %v348 = vld [vmem:[#allocation5 + $0x38c] sm:$0xf]
    %v349 = vld [vmem:[#allocation5 + $0x390] sm:$0xf]
    %v350 = vld [vmem:[#allocation5 + $0x394] sm:$0xf]
    %v351 = vld [vmem:[#allocation5 + $0x398] sm:$0xf]
    %v352 = vld [vmem:[#allocation5 + $0x39c] sm:$0xf]
    %v353 = vld [vmem:[#allocation5 + $0x3a0] sm:$0xf]
    %v354 = vld [vmem:[#allocation5 + $0x3a4] sm:$0xf]
    %v355 = vld [vmem:[#allocation5 + $0x3a8] sm:$0xf]
    %v356 = vld [vmem:[#allocation5 + $0x3ac] sm:$0xf]
    %v357 = vld [vmem:[#allocation5 + $0x3b0] sm:$0xf]
    %v358 = vld [vmem:[#allocation5 + $0x3b4] sm:$0xf]
    %v359 = vld [vmem:[#allocation5 + $0x3b8] sm:$0xf]
    %v360 = vld [vmem:[#allocation5 + $0x3bc] sm:$0xf]
    %v361 = vld [vmem:[#allocation5 + $0x3c0] sm:$0xf]
    %v362 = vld [vmem:[#allocation5 + $0x3c4] sm:$0xf]
    %v363 = vld [vmem:[#allocation5 + $0x3c8] sm:$0xf]
    %v364 = vld [vmem:[#allocation5 + $0x3cc] sm:$0xf]
    %v365 = vld [vmem:[#allocation5 + $0x3d0] sm:$0xf]
    %v366 = vld [vmem:[#allocation5 + $0x3d4] sm:$0xf]
    %v367 = vld [vmem:[#allocation5 + $0x3d8] sm:$0xf]
    %v368 = vld [vmem:[#allocation5 + $0x3dc] sm:$0xf]
    %v369 = vld [vmem:[#allocation5 + $0x3e0] sm:$0xf]
    %v370 = vld [vmem:[#allocation5 + $0x3e4] sm:$0xf]
    %v371 = vld [vmem:[#allocation5 + $0x3e8] sm:$0xf]
    %v372 = vld [vmem:[#allocation5 + $0x3ec] sm:$0xf]
    %v373 = vld [vmem:[#allocation5 + $0x3f0] sm:$0xf]
    %v374 = vld [vmem:[#allocation5 + $0x3f4] sm:$0xf]
    %v375 = vld [vmem:[#allocation5 + $0x3f8] sm:$0xf]
    %v376 = vld [vmem:[#allocation5 + $0x3fc] sm:$0xf]
    %v377 = vld [vmem:[#allocation5 + $0x400] sm:$0xf]
    %v378 = vld [vmem:[#allocation5 + $0x404] sm:$0xf]
    %v379 = vld [vmem:[#allocation5 + $0x408] sm:$0xf]
    %v380 = vld [vmem:[#allocation5 + $0x40c] sm:$0xf]
    %v381 = vld [vmem:[#allocation5 + $0x410] sm:$0xf]
    %v382 = vld [vmem:[#allocation5 + $0x414] sm:$0xf]
    %v383 = vld [vmem:[#allocation5 + $0x418] sm:$0xf]
    %v384 = vld [vmem:[#allocation5 + $0x41c] sm:$0xf]
    %v385 = vld [vmem:[#allocation5 + $0x420] sm:$0xf]
    %v386 = vld [vmem:[#allocation5 + $0x424] sm:$0xf]
    %v387 = vld [vmem:[#allocation5 + $0x428] sm:$0xf]
    %v388 = vld [vmem:[#allocation5 + $0x42c] sm:$0xf]
    %v389 = vld [vmem:[#allocation5 + $0x430] sm:$0xf]
    %v390 = vld [vmem:[#allocation5 + $0x434] sm:$0xf]
    %v391 = vld [vmem:[#allocation5 + $0x438] sm:$0xf]
    %v392 = vld [vmem:[#allocation5 + $0x43c] sm:$0xf]
    %v393 = vld [vmem:[#allocation5 + $0x440] sm:$0xf]
    %v394 = vld [vmem:[#allocation5 + $0x444] sm:$0xf]
    %v395 = vld [vmem:[#allocation5 + $0x448] sm:$0xf]
    %v396 = vld [vmem:[#allocation5 + $0x44c] sm:$0xf]
    %v397 = vld [vmem:[#allocation5 + $0x450] sm:$0xf]
    %v398 = vld [vmem:[#allocation5 + $0x454] sm:$0xf]
    %v399 = vld [vmem:[#allocation5 + $0x458] sm:$0xf]
    %v400 = vld [vmem:[#allocation5 + $0x45c] sm:$0xf]
    %v401 = vld [vmem:[#allocation5 + $0x460] sm:$0xf]
    %v402 = vld [vmem:[#allocation5 + $0x464] sm:$0xf]
    %v403 = vld [vmem:[#allocation5 + $0x468] sm:$0xf]
    %v404 = vld [vmem:[#allocation5 + $0x46c] sm:$0xf]
    %v405 = vld [vmem:[#allocation5 + $0x470] sm:$0xf]
    %v406 = vld [vmem:[#allocation5 + $0x474] sm:$0xf]
    %v407 = vld [vmem:[#allocation5 + $0x478] sm:$0xf]
    %v408 = vld [vmem:[#allocation5 + $0x47c] sm:$0xf]
    %v409 = vld [vmem:[#allocation5 + $0x480] sm:$0xf]
    %v410 = vld [vmem:[#allocation5 + $0x484] sm:$0xf]
    %v411 = vld [vmem:[#allocation5 + $0x488] sm:$0xf]
    %v412 = vld [vmem:[#allocation5 + $0x48c] sm:$0xf]
    %v413 = vld [vmem:[#allocation5 + $0x490] sm:$0xf]
    %v414 = vld [vmem:[#allocation5 + $0x494] sm:$0xf]
    %v415 = vld [vmem:[#allocation5 + $0x498] sm:$0xf]
    %v416 = vld [vmem:[#allocation5 + $0x49c] sm:$0xf]
    %v417 = vld [vmem:[#allocation5 + $0x4a0] sm:$0xf]
    %v418 = vld [vmem:[#allocation5 + $0x4a4] sm:$0xf]
    %v419 = vld [vmem:[#allocation5 + $0x4a8] sm:$0xf]
    %v420 = vld [vmem:[#allocation5 + $0x4ac] sm:$0xf]
    %v421 = vld [vmem:[#allocation5 + $0x4b0] sm:$0xf]
    %v422 = vld [vmem:[#allocation5 + $0x4b4] sm:$0xf]
    %v423 = vld [vmem:[#allocation5 + $0x4b8] sm:$0xf]
    %v424 = vld [vmem:[#allocation5 + $0x4bc] sm:$0xf]
    %v425 = vld [vmem:[#allocation5 + $0x4c0] sm:$0xf]
    %v426 = vld [vmem:[#allocation5 + $0x4c4] sm:$0xf]
    %v427 = vld [vmem:[#allocation5 + $0x4c8] sm:$0xf]
    %v428 = vld [vmem:[#allocation5 + $0x4cc] sm:$0xf]
    %v429 = vld [vmem:[#allocation5 + $0x4d0] sm:$0xf]
    %v430 = vld [vmem:[#allocation5 + $0x4d4] sm:$0xf]
    %v431 = vld [vmem:[#allocation5 + $0x4d8] sm:$0xf]
    %v432 = vld [vmem:[#allocation5 + $0x4dc] sm:$0xf]
    %v433 = vld [vmem:[#allocation5 + $0x4e0] sm:$0xf]
    %v434 = vld [vmem:[#allocation5 + $0x4e4] sm:$0xf]
    %v435 = vld [vmem:[#allocation5 + $0x4e8] sm:$0xf]
    %v436 = vld [vmem:[#allocation5 + $0x4ec] sm:$0xf]
    %v437 = vld [vmem:[#allocation5 + $0x4f0] sm:$0xf]
    %v438 = vld [vmem:[#allocation5 + $0x4f4] sm:$0xf]
    %v439 = vld [vmem:[#allocation5 + $0x4f8] sm:$0xf]
    %v440 = vld [vmem:[#allocation5 + $0x4fc] sm:$0xf]
    %v441 = vld [vmem:[#allocation5 + $0x500] sm:$0xf]
    %v442 = vld [vmem:[#allocation5 + $0x504] sm:$0xf]
    %v443 = vld [vmem:[#allocation5 + $0x508] sm:$0xf]
    %v444 = vld [vmem:[#allocation5 + $0x50c] sm:$0xf]
    %v445 = vld [vmem:[#allocation5 + $0x510] sm:$0xf]
    %v446 = vld [vmem:[#allocation5 + $0x514] sm:$0xf]
    %v447 = vld [vmem:[#allocation5 + $0x518] sm:$0xf]
    %v448 = vld [vmem:[#allocation5 + $0x51c] sm:$0xf]
    %v449 = vld [vmem:[#allocation5 + $0x520] sm:$0xf]
    %v450 = vld [vmem:[#allocation5 + $0x524] sm:$0xf]
    %v451 = vld [vmem:[#allocation5 + $0x528] sm:$0xf]
    %v452 = vld [vmem:[#allocation5 + $0x52c] sm:$0xf]
    %v453 = vld [vmem:[#allocation5 + $0x530] sm:$0xf]
    %v454 = vld [vmem:[#allocation5 + $0x534] sm:$0xf]
    %v455 = vld [vmem:[#allocation5 + $0x538] sm:$0xf]
    %v456 = vld [vmem:[#allocation5 + $0x53c] sm:$0xf]
    %v457 = vld [vmem:[#allocation5 + $0x540] sm:$0xf]
    %v458 = vld [vmem:[#allocation5 + $0x544] sm:$0xf]
    %v459 = vld [vmem:[#allocation5 + $0x548] sm:$0xf]
    %v460 = vld [vmem:[#allocation5 + $0x54c] sm:$0xf]
    %v461 = vld [vmem:[#allocation5 + $0x550] sm:$0xf]
    %v462 = vld [vmem:[#allocation5 + $0x554] sm:$0xf]
    %v463 = vld [vmem:[#allocation5 + $0x558] sm:$0xf]
    %v464 = vld [vmem:[#allocation5 + $0x55c] sm:$0xf]
    %v465 = vld [vmem:[#allocation5 + $0x560] sm:$0xf]
    %v466 = vld [vmem:[#allocation5 + $0x564] sm:$0xf]
    %v467 = vld [vmem:[#allocation5 + $0x568] sm:$0xf]
    %v468 = vld [vmem:[#allocation5 + $0x56c] sm:$0xf]
    %v469 = vld [vmem:[#allocation5 + $0x570] sm:$0xf]
    %v470 = vld [vmem:[#allocation5 + $0x574] sm:$0xf]
    %v471 = vld [vmem:[#allocation5 + $0x578] sm:$0xf]
    %v472 = vld [vmem:[#allocation5 + $0x57c] sm:$0xf]
    %v473 = vld [vmem:[#allocation5 + $0x580] sm:$0xf]
    %v474 = vld [vmem:[#allocation5 + $0x584] sm:$0xf]
    %v475 = vld [vmem:[#allocation5 + $0x588] sm:$0xf]
    %v476 = vld [vmem:[#allocation5 + $0x58c] sm:$0xf]
    %v477 = vld [vmem:[#allocation5 + $0x590] sm:$0xf]
    %v478 = vld [vmem:[#allocation5 + $0x594] sm:$0xf]
    %v479 = vld [vmem:[#allocation5 + $0x598] sm:$0xf]
    %v480 = vld [vmem:[#allocation5 + $0x59c] sm:$0xf]
    %v481 = vld [vmem:[#allocation5 + $0x5a0] sm:$0xf]
    %v482 = vld [vmem:[#allocation5 + $0x5a4] sm:$0xf]
    %v483 = vld [vmem:[#allocation5 + $0x5a8] sm:$0xf]
    %v484 = vld [vmem:[#allocation5 + $0x5ac] sm:$0xf]
    %v485 = vld [vmem:[#allocation5 + $0x5b0] sm:$0xf]
    %v486 = vld [vmem:[#allocation5 + $0x5b4] sm:$0xf]
    %v487 = vld [vmem:[#allocation5 + $0x5b8] sm:$0xf]
    %v488 = vld [vmem:[#allocation5 + $0x5bc] sm:$0xf]
    %v489 = vld [vmem:[#allocation5 + $0x5c0] sm:$0xf]
    %v490 = vld [vmem:[#allocation5 + $0x5c4] sm:$0xf]
    %v491 = vld [vmem:[#allocation5 + $0x5c8] sm:$0xf]
    %v492 = vld [vmem:[#allocation5 + $0x5cc] sm:$0xf]
    %v493 = vld [vmem:[#allocation5 + $0x5d0] sm:$0xf]
    %v494 = vld [vmem:[#allocation5 + $0x5d4] sm:$0xf]
    %v495 = vld [vmem:[#allocation5 + $0x5d8] sm:$0xf]
    %v496 = vld [vmem:[#allocation5 + $0x5dc] sm:$0xf]
    %v497 = vld [vmem:[#allocation5 + $0x5e0] sm:$0xf]
    %v498 = vld [vmem:[#allocation5 + $0x5e4] sm:$0xf]
    %v499 = vld [vmem:[#allocation5 + $0x5e8] sm:$0xf]
    %v500 = vld [vmem:[#allocation5 + $0x5ec] sm:$0xf]
    %v501 = vld [vmem:[#allocation5 + $0x5f0] sm:$0xf]
    %v502 = vld [vmem:[#allocation5 + $0x5f4] sm:$0xf]
    %v503 = vld [vmem:[#allocation5 + $0x5f8] sm:$0xf]
    %v504 = vld [vmem:[#allocation5 + $0x5fc] sm:$0xf]
    %v505 = vld [vmem:[%s2] sm:$0x1]
    %v507 = vperm.slane %v505, 0
    %v521 = vunpack.c.l.b16 %v109
    %v522 = vunpack.c.h.b16 %v109
    %v523 = vunpack.c.l.b16 %v110
    %v524 = vunpack.c.h.b16 %v110
    %v525 = vunpack.c.l.b16 %v111
    %v526 = vunpack.c.h.b16 %v111
    %v527 = vunpack.c.l.b16 %v112
    %v528 = vunpack.c.h.b16 %v112
    %v529 = vunpack.c.l.b16 %v113
    %v530 = vunpack.c.h.b16 %v113
    %v531 = vunpack.c.l.b16 %v114
    %v532 = vunpack.c.h.b16 %v114
    %v533 = vunpack.c.l.b16 %v115
    %v534 = vunpack.c.h.b16 %v115
    %v535 = vunpack.c.l.b16 %v116
    %v536 = vunpack.c.h.b16 %v116
    %v537 = vunpack.c.l.b16 %v117
    %v538 = vunpack.c.h.b16 %v117
    %v539 = vunpack.c.l.b16 %v118
    %v540 = vunpack.c.h.b16 %v118
    %v541 = vunpack.c.l.b16 %v119
    %v542 = vunpack.c.h.b16 %v119
    %v543 = vunpack.c.l.b16 %v120
    %v544 = vunpack.c.h.b16 %v120
    %v545 = vpack.c.b16 %v521, %v521
    %v546 = vpack.c.b16 %v522, %v522
    %v547 = vpack.c.b16 %v523, %v523
    %v548 = vpack.c.b16 %v524, %v524
    %v549 = vpack.c.b16 %v525, %v525
    %v550 = vpack.c.b16 %v526, %v526
    %v551 = vpack.c.b16 %v527, %v527
    %v552 = vpack.c.b16 %v528, %v528
    %v553 = vpack.c.b16 %v529, %v529
    %v554 = vpack.c.b16 %v530, %v530
    %v555 = vpack.c.b16 %v531, %v531
    %v556 = vpack.c.b16 %v532, %v532
    %v557 = vpack.c.b16 %v533, %v533
    %v558 = vpack.c.b16 %v534, %v534
    %v559 = vpack.c.b16 %v535, %v535
    %v560 = vpack.c.b16 %v536, %v536
    %v561 = vpack.c.b16 %v537, %v537
    %v562 = vpack.c.b16 %v538, %v538
    %v563 = vpack.c.b16 %v539, %v539
    %v564 = vpack.c.b16 %v540, %v540
    %v565 = vpack.c.b16 %v541, %v541
    %v566 = vpack.c.b16 %v542, %v542
    %v567 = vpack.c.b16 %v543, %v543
    %v568 = vpack.c.b16 %v544, %v544
    %v977 = vunpack.c.l.b16 %v121
    %v978 = vunpack.c.l.b16 %v122
    %v979 = vunpack.c.l.b16 %v123
    %v980 = vunpack.c.l.b16 %v124
    %v981 = vunpack.c.l.b16 %v125
    %v982 = vunpack.c.l.b16 %v126
    %v983 = vunpack.c.l.b16 %v127
    %v984 = vunpack.c.l.b16 %v128
    %v985 = vunpack.c.l.b16 %v129
    %v986 = vunpack.c.l.b16 %v130
    %v987 = vunpack.c.l.b16 %v131
    %v988 = vunpack.c.l.b16 %v132
    %v989 = vunpack.c.l.b16 %v133
    %v990 = vunpack.c.l.b16 %v134
    %v991 = vunpack.c.l.b16 %v135
    %v992 = vunpack.c.l.b16 %v136
    %v993 = vunpack.c.l.b16 %v137
    %v994 = vunpack.c.l.b16 %v138
    %v995 = vunpack.c.l.b16 %v139
    %v996 = vunpack.c.l.b16 %v140
    %v997 = vunpack.c.l.b16 %v141
    %v998 = vunpack.c.l.b16 %v142
    %v999 = vunpack.c.l.b16 %v143
    %v1000 = vunpack.c.l.b16 %v144
    %v1001 = vunpack.c.l.b16 %v145
    %v1002 = vunpack.c.l.b16 %v146
    %v1003 = vunpack.c.l.b16 %v147
    %v1004 = vunpack.c.l.b16 %v148
    %v1005 = vunpack.c.l.b16 %v149
    %v1006 = vunpack.c.l.b16 %v150
    %v1007 = vunpack.c.l.b16 %v151
    %v1008 = vunpack.c.l.b16 %v152
    %v1009 = vunpack.c.l.b16 %v153
    %v1010 = vunpack.c.l.b16 %v154
    %v1011 = vunpack.c.l.b16 %v155
    %v1012 = vunpack.c.l.b16 %v156
    %v1013 = vunpack.c.l.b16 %v157
    %v1014 = vunpack.c.l.b16 %v158
    %v1015 = vunpack.c.l.b16 %v159
    %v1016 = vunpack.c.l.b16 %v160
    %v1017 = vunpack.c.l.b16 %v161
    %v1018 = vunpack.c.l.b16 %v162
    %v1019 = vunpack.c.l.b16 %v163
    %v1020 = vunpack.c.l.b16 %v164
    %v1021 = vunpack.c.l.b16 %v165
    %v1022 = vunpack.c.l.b16 %v166
    %v1023 = vunpack.c.l.b16 %v167
    %v1024 = vunpack.c.l.b16 %v168
    %v1025 = vunpack.c.l.b16 %v169
    %v1026 = vunpack.c.l.b16 %v170
    %v1027 = vunpack.c.l.b16 %v171
    %v1028 = vunpack.c.l.b16 %v172
    %v1029 = vunpack.c.l.b16 %v173
    %v1030 = vunpack.c.l.b16 %v174
    %v1031 = vunpack.c.l.b16 %v175
    %v1032 = vunpack.c.l.b16 %v176
    %v1033 = vunpack.c.l.b16 %v177
    %v1034 = vunpack.c.l.b16 %v178
    %v1035 = vunpack.c.l.b16 %v179
    %v1036 = vunpack.c.l.b16 %v180
    %v1037 = vunpack.c.l.b16 %v181
    %v1038 = vunpack.c.l.b16 %v182
    %v1039 = vunpack.c.l.b16 %v183
    %v1040 = vunpack.c.l.b16 %v184
    %v1041 = vunpack.c.l.b16 %v185
    %v1042 = vunpack.c.l.b16 %v186
    %v1043 = vunpack.c.l.b16 %v187
    %v1044 = vunpack.c.l.b16 %v188
    %v1045 = vunpack.c.l.b16 %v189
    %v1046 = vunpack.c.l.b16 %v190
    %v1047 = vunpack.c.l.b16 %v191
    %v1048 = vunpack.c.l.b16 %v192
    %v1049 = vunpack.c.l.b16 %v193
    %v1050 = vunpack.c.l.b16 %v194
    %v1051 = vunpack.c.l.b16 %v195
    %v1052 = vunpack.c.l.b16 %v196
    %v1053 = vunpack.c.l.b16 %v197
    %v1054 = vunpack.c.l.b16 %v198
    %v1055 = vunpack.c.l.b16 %v199
    %v1056 = vunpack.c.l.b16 %v200
    %v1057 = vunpack.c.l.b16 %v201
    %v1058 = vunpack.c.l.b16 %v202
    %v1059 = vunpack.c.l.b16 %v203
    %v1060 = vunpack.c.l.b16 %v204
    %v1061 = vunpack.c.l.b16 %v205
    %v1062 = vunpack.c.l.b16 %v206
    %v1063 = vunpack.c.l.b16 %v207
    %v1064 = vunpack.c.l.b16 %v208
    %v1065 = vunpack.c.l.b16 %v209
    %v1066 = vunpack.c.l.b16 %v210
    %v1067 = vunpack.c.l.b16 %v211
    %v1068 = vunpack.c.l.b16 %v212
    %v1069 = vunpack.c.l.b16 %v213
    %v1070 = vunpack.c.l.b16 %v214
    %v1071 = vunpack.c.l.b16 %v215
    %v1072 = vunpack.c.l.b16 %v216
    %v1073 = vunpack.c.l.b16 %v217
    %v1074 = vunpack.c.l.b16 %v218
    %v1075 = vunpack.c.l.b16 %v219
    %v1076 = vunpack.c.l.b16 %v220
    %v1077 = vunpack.c.l.b16 %v221
    %v1078 = vunpack.c.l.b16 %v222
    %v1079 = vunpack.c.l.b16 %v223
    %v1080 = vunpack.c.l.b16 %v224
    %v1081 = vunpack.c.l.b16 %v225
    %v1082 = vunpack.c.l.b16 %v226
    %v1083 = vunpack.c.l.b16 %v227
    %v1084 = vunpack.c.l.b16 %v228
    %v1085 = vunpack.c.l.b16 %v229
    %v1086 = vunpack.c.l.b16 %v230
    %v1087 = vunpack.c.l.b16 %v231
    %v1088 = vunpack.c.l.b16 %v232
    %v1089 = vunpack.c.l.b16 %v233
    %v1090 = vunpack.c.l.b16 %v234
    %v1091 = vunpack.c.l.b16 %v235
    %v1092 = vunpack.c.l.b16 %v236
    %v1093 = vunpack.c.l.b16 %v237
    %v1094 = vunpack.c.l.b16 %v238
    %v1095 = vunpack.c.l.b16 %v239
    %v1096 = vunpack.c.l.b16 %v240
    %v1097 = vunpack.c.l.b16 %v241
    %v1098 = vunpack.c.l.b16 %v242
    %v1099 = vunpack.c.l.b16 %v243
    %v1100 = vunpack.c.l.b16 %v244
    %v1101 = vunpack.c.l.b16 %v245
    %v1102 = vunpack.c.l.b16 %v246
    %v1103 = vunpack.c.l.b16 %v247
    %v1104 = vunpack.c.l.b16 %v248
    %v1105 = vunpack.c.l.b16 %v249
    %v1106 = vunpack.c.l.b16 %v250
    %v1107 = vunpack.c.l.b16 %v251
    %v1108 = vunpack.c.l.b16 %v252
    %v1109 = vunpack.c.l.b16 %v253
    %v1110 = vunpack.c.l.b16 %v254
    %v1111 = vunpack.c.l.b16 %v255
    %v1112 = vunpack.c.l.b16 %v256
    %v1113 = vunpack.c.l.b16 %v257
    %v1114 = vunpack.c.l.b16 %v258
    %v1115 = vunpack.c.l.b16 %v259
    %v1116 = vunpack.c.l.b16 %v260
    %v1117 = vunpack.c.l.b16 %v261
    %v1118 = vunpack.c.l.b16 %v262
    %v1119 = vunpack.c.l.b16 %v263
    %v1120 = vunpack.c.l.b16 %v264
    %v1121 = vunpack.c.l.b16 %v265
    %v1122 = vunpack.c.l.b16 %v266
    %v1123 = vunpack.c.l.b16 %v267
    %v1124 = vunpack.c.l.b16 %v268
    %v1125 = vunpack.c.l.b16 %v269
    %v1126 = vunpack.c.l.b16 %v270
    %v1127 = vunpack.c.l.b16 %v271
    %v1128 = vunpack.c.l.b16 %v272
    %v1129 = vunpack.c.l.b16 %v273
    %v1130 = vunpack.c.l.b16 %v274
    %v1131 = vunpack.c.l.b16 %v275
    %v1132 = vunpack.c.l.b16 %v276
    %v1133 = vunpack.c.l.b16 %v277
    %v1134 = vunpack.c.l.b16 %v278
    %v1135 = vunpack.c.l.b16 %v279
    %v1136 = vunpack.c.l.b16 %v280
    %v1137 = vunpack.c.l.b16 %v281
    %v1138 = vunpack.c.l.b16 %v282
    %v1139 = vunpack.c.l.b16 %v283
    %v1140 = vunpack.c.l.b16 %v284
    %v1141 = vunpack.c.l.b16 %v285
    %v1142 = vunpack.c.l.b16 %v286
    %v1143 = vunpack.c.l.b16 %v287
    %v1144 = vunpack.c.l.b16 %v288
    %v1145 = vunpack.c.l.b16 %v289
    %v1146 = vunpack.c.l.b16 %v290
    %v1147 = vunpack.c.l.b16 %v291
    %v1148 = vunpack.c.l.b16 %v292
    %v1149 = vunpack.c.l.b16 %v293
    %v1150 = vunpack.c.l.b16 %v294
    %v1151 = vunpack.c.l.b16 %v295
    %v1152 = vunpack.c.l.b16 %v296
    %v1153 = vunpack.c.l.b16 %v297
    %v1154 = vunpack.c.l.b16 %v298
    %v1155 = vunpack.c.l.b16 %v299
    %v1156 = vunpack.c.l.b16 %v300
    %v1157 = vunpack.c.l.b16 %v301
    %v1158 = vunpack.c.l.b16 %v302
    %v1159 = vunpack.c.l.b16 %v303
    %v1160 = vunpack.c.l.b16 %v304
    %v1161 = vunpack.c.l.b16 %v305
    %v1162 = vunpack.c.l.b16 %v306
    %v1163 = vunpack.c.l.b16 %v307
    %v1164 = vunpack.c.l.b16 %v308
    %v1165 = vunpack.c.l.b16 %v309
    %v1166 = vunpack.c.l.b16 %v310
    %v1167 = vunpack.c.l.b16 %v311
    %v1168 = vunpack.c.l.b16 %v312
    %v1169 = vunpack.c.l.b16 %v313
    %v1170 = vunpack.c.l.b16 %v314
    %v1171 = vunpack.c.l.b16 %v315
    %v1172 = vunpack.c.l.b16 %v316
    %v1173 = vunpack.c.l.b16 %v317
    %v1174 = vunpack.c.l.b16 %v318
    %v1175 = vunpack.c.l.b16 %v319
    %v1176 = vunpack.c.l.b16 %v320
    %v1177 = vunpack.c.l.b16 %v321
    %v1178 = vunpack.c.l.b16 %v322
    %v1179 = vunpack.c.l.b16 %v323
    %v1180 = vunpack.c.l.b16 %v324
    %v1181 = vunpack.c.l.b16 %v325
    %v1182 = vunpack.c.l.b16 %v326
    %v1183 = vunpack.c.l.b16 %v327
    %v1184 = vunpack.c.l.b16 %v328
    %v1185 = vunpack.c.l.b16 %v329
    %v1186 = vunpack.c.l.b16 %v330
    %v1187 = vunpack.c.l.b16 %v331
    %v1188 = vunpack.c.l.b16 %v332
    %v1189 = vunpack.c.l.b16 %v333
    %v1190 = vunpack.c.l.b16 %v334
    %v1191 = vunpack.c.l.b16 %v335
    %v1192 = vunpack.c.l.b16 %v336
    %v1193 = vunpack.c.l.b16 %v337
    %v1194 = vunpack.c.l.b16 %v338
    %v1195 = vunpack.c.l.b16 %v339
    %v1196 = vunpack.c.l.b16 %v340
    %v1197 = vunpack.c.l.b16 %v341
    %v1198 = vunpack.c.l.b16 %v342
    %v1199 = vunpack.c.l.b16 %v343
    %v1200 = vunpack.c.l.b16 %v344
    %v1201 = vunpack.c.l.b16 %v345
    %v1202 = vunpack.c.l.b16 %v346
    %v1203 = vunpack.c.l.b16 %v347
    %v1204 = vunpack.c.l.b16 %v348
    %v1205 = vunpack.c.l.b16 %v349
    %v1206 = vunpack.c.l.b16 %v350
    %v1207 = vunpack.c.l.b16 %v351
    %v1208 = vunpack.c.l.b16 %v352
    %v1209 = vunpack.c.l.b16 %v353
    %v1210 = vunpack.c.l.b16 %v354
    %v1211 = vunpack.c.l.b16 %v355
    %v1212 = vunpack.c.l.b16 %v356
    %v1213 = vunpack.c.l.b16 %v357
    %v1214 = vunpack.c.l.b16 %v358
    %v1215 = vunpack.c.l.b16 %v359
    %v1216 = vunpack.c.l.b16 %v360
    %v1217 = vunpack.c.l.b16 %v361
    %v1218 = vunpack.c.l.b16 %v362
    %v1219 = vunpack.c.l.b16 %v363
    %v1220 = vunpack.c.l.b16 %v364
    %v1221 = vunpack.c.l.b16 %v365
    %v1222 = vunpack.c.l.b16 %v366
    %v1223 = vunpack.c.l.b16 %v367
    %v1224 = vunpack.c.l.b16 %v368
    %v1225 = vunpack.c.l.b16 %v369
    %v1226 = vunpack.c.l.b16 %v370
    %v1227 = vunpack.c.l.b16 %v371
    %v1228 = vunpack.c.l.b16 %v372
    %v1229 = vunpack.c.l.b16 %v373
    %v1230 = vunpack.c.l.b16 %v374
    %v1231 = vunpack.c.l.b16 %v375
    %v1232 = vunpack.c.l.b16 %v376
    %v1233 = vunpack.c.l.b16 %v377
    %v1234 = vunpack.c.l.b16 %v378
    %v1235 = vunpack.c.l.b16 %v379
    %v1236 = vunpack.c.l.b16 %v380
    %v1237 = vunpack.c.l.b16 %v381
    %v1238 = vunpack.c.l.b16 %v382
    %v1239 = vunpack.c.l.b16 %v383
    %v1240 = vunpack.c.l.b16 %v384
    %v1241 = vunpack.c.l.b16 %v385
    %v1242 = vunpack.c.l.b16 %v386
    %v1243 = vunpack.c.l.b16 %v387
    %v1244 = vunpack.c.l.b16 %v388
    %v1245 = vunpack.c.l.b16 %v389
    %v1246 = vunpack.c.l.b16 %v390
    %v1247 = vunpack.c.l.b16 %v391
    %v1248 = vunpack.c.l.b16 %v392
    %v1249 = vunpack.c.l.b16 %v393
    %v1250 = vunpack.c.l.b16 %v394
    %v1251 = vunpack.c.l.b16 %v395
    %v1252 = vunpack.c.l.b16 %v396
    %v1253 = vunpack.c.l.b16 %v397
    %v1254 = vunpack.c.l.b16 %v398
    %v1255 = vunpack.c.l.b16 %v399
    %v1256 = vunpack.c.l.b16 %v400
    %v1257 = vunpack.c.l.b16 %v401
    %v1258 = vunpack.c.l.b16 %v402
    %v1259 = vunpack.c.l.b16 %v403
    %v1260 = vunpack.c.l.b16 %v404
    %v1261 = vunpack.c.l.b16 %v405
    %v1262 = vunpack.c.l.b16 %v406
    %v1263 = vunpack.c.l.b16 %v407
    %v1264 = vunpack.c.l.b16 %v408
    %v1265 = vunpack.c.l.b16 %v409
    %v1266 = vunpack.c.l.b16 %v410
    %v1267 = vunpack.c.l.b16 %v411
    %v1268 = vunpack.c.l.b16 %v412
    %v1269 = vunpack.c.l.b16 %v413
    %v1270 = vunpack.c.l.b16 %v414
    %v1271 = vunpack.c.l.b16 %v415
    %v1272 = vunpack.c.l.b16 %v416
    %v1273 = vunpack.c.l.b16 %v417
    %v1274 = vunpack.c.l.b16 %v418
    %v1275 = vunpack.c.l.b16 %v419
    %v1276 = vunpack.c.l.b16 %v420
    %v1277 = vunpack.c.l.b16 %v421
    %v1278 = vunpack.c.l.b16 %v422
    %v1279 = vunpack.c.l.b16 %v423
    %v1280 = vunpack.c.l.b16 %v424
    %v1281 = vunpack.c.l.b16 %v425
    %v1282 = vunpack.c.l.b16 %v426
    %v1283 = vunpack.c.l.b16 %v427
    %v1284 = vunpack.c.l.b16 %v428
    %v1285 = vunpack.c.l.b16 %v429
    %v1286 = vunpack.c.l.b16 %v430
    %v1287 = vunpack.c.l.b16 %v431
    %v1288 = vunpack.c.l.b16 %v432
    %v1289 = vunpack.c.l.b16 %v433
    %v1290 = vunpack.c.l.b16 %v434
    %v1291 = vunpack.c.l.b16 %v435
    %v1292 = vunpack.c.l.b16 %v436
    %v1293 = vunpack.c.l.b16 %v437
    %v1294 = vunpack.c.l.b16 %v438
    %v1295 = vunpack.c.l.b16 %v439
    %v1296 = vunpack.c.l.b16 %v440
    %v1297 = vunpack.c.l.b16 %v441
    %v1298 = vunpack.c.l.b16 %v442
    %v1299 = vunpack.c.l.b16 %v443
    %v1300 = vunpack.c.l.b16 %v444
    %v1301 = vunpack.c.l.b16 %v445
    %v1302 = vunpack.c.l.b16 %v446
    %v1303 = vunpack.c.l.b16 %v447
    %v1304 = vunpack.c.l.b16 %v448
    %v1305 = vunpack.c.l.b16 %v449
    %v1306 = vunpack.c.l.b16 %v450
    %v1307 = vunpack.c.l.b16 %v451
    %v1308 = vunpack.c.l.b16 %v452
    %v1309 = vunpack.c.l.b16 %v453
    %v1310 = vunpack.c.l.b16 %v454
    %v1311 = vunpack.c.l.b16 %v455
    %v1312 = vunpack.c.l.b16 %v456
    %v1313 = vunpack.c.l.b16 %v457
    %v1314 = vunpack.c.l.b16 %v458
    %v1315 = vunpack.c.l.b16 %v459
    %v1316 = vunpack.c.l.b16 %v460
    %v1317 = vunpack.c.l.b16 %v461
    %v1318 = vunpack.c.l.b16 %v462
    %v1319 = vunpack.c.l.b16 %v463
    %v1320 = vunpack.c.l.b16 %v464
    %v1321 = vunpack.c.l.b16 %v465
    %v1322 = vunpack.c.l.b16 %v466
    %v1323 = vunpack.c.l.b16 %v467
    %v1324 = vunpack.c.l.b16 %v468
    %v1325 = vunpack.c.l.b16 %v469
    %v1326 = vunpack.c.l.b16 %v470
    %v1327 = vunpack.c.l.b16 %v471
    %v1328 = vunpack.c.l.b16 %v472
    %v1329 = vunpack.c.l.b16 %v473
    %v1330 = vunpack.c.l.b16 %v474
    %v1331 = vunpack.c.l.b16 %v475
    %v1332 = vunpack.c.l.b16 %v476
    %v1333 = vunpack.c.l.b16 %v477
    %v1334 = vunpack.c.l.b16 %v478
    %v1335 = vunpack.c.l.b16 %v479
    %v1336 = vunpack.c.l.b16 %v480
    %v1337 = vunpack.c.l.b16 %v481
    %v1338 = vunpack.c.l.b16 %v482
    %v1339 = vunpack.c.l.b16 %v483
    %v1340 = vunpack.c.l.b16 %v484
    %v1341 = vunpack.c.l.b16 %v485
    %v1342 = vunpack.c.l.b16 %v486
    %v1343 = vunpack.c.l.b16 %v487
    %v1344 = vunpack.c.l.b16 %v488
    %v1345 = vunpack.c.l.b16 %v489
    %v1346 = vunpack.c.l.b16 %v490
    %v1347 = vunpack.c.l.b16 %v491
    %v1348 = vunpack.c.l.b16 %v492
    %v1349 = vunpack.c.l.b16 %v493
    %v1350 = vunpack.c.l.b16 %v494
    %v1351 = vunpack.c.l.b16 %v495
    %v1352 = vunpack.c.l.b16 %v496
    %v1353 = vunpack.c.l.b16 %v497
    %v1354 = vunpack.c.l.b16 %v498
    %v1355 = vunpack.c.l.b16 %v499
    %v1356 = vunpack.c.l.b16 %v500
    %v1357 = vunpack.c.l.b16 %v501
    %v1358 = vunpack.c.l.b16 %v502
    %v1359 = vunpack.c.l.b16 %v503
    %v1360 = vunpack.c.l.b16 %v504
    %v1361 = vpack.c.b16 %v978, %v977
    %v1362 = vpack.c.b16 %v980, %v979
    %v1363 = vpack.c.b16 %v982, %v981
    %v1364 = vpack.c.b16 %v984, %v983
    %v1365 = vpack.c.b16 %v986, %v985
    %v1366 = vpack.c.b16 %v988, %v987
    %v1367 = vpack.c.b16 %v990, %v989
    %v1368 = vpack.c.b16 %v992, %v991
    %v1369 = vpack.c.b16 %v994, %v993
    %v1370 = vpack.c.b16 %v996, %v995
    %v1371 = vpack.c.b16 %v998, %v997
    %v1372 = vpack.c.b16 %v1000, %v999
    %v1373 = vpack.c.b16 %v1002, %v1001
    %v1374 = vpack.c.b16 %v1004, %v1003
    %v1375 = vpack.c.b16 %v1006, %v1005
    %v1376 = vpack.c.b16 %v1008, %v1007
    %v1377 = vpack.c.b16 %v1010, %v1009
    %v1378 = vpack.c.b16 %v1012, %v1011
    %v1379 = vpack.c.b16 %v1014, %v1013
    %v1380 = vpack.c.b16 %v1016, %v1015
    %v1381 = vpack.c.b16 %v1018, %v1017
    %v1382 = vpack.c.b16 %v1020, %v1019
    %v1383 = vpack.c.b16 %v1022, %v1021
    %v1384 = vpack.c.b16 %v1024, %v1023
    %v1385 = vpack.c.b16 %v1026, %v1025
    %v1386 = vpack.c.b16 %v1028, %v1027
    %v1387 = vpack.c.b16 %v1030, %v1029
    %v1388 = vpack.c.b16 %v1032, %v1031
    %v1389 = vpack.c.b16 %v1034, %v1033
    %v1390 = vpack.c.b16 %v1036, %v1035
    %v1391 = vpack.c.b16 %v1038, %v1037
    %v1392 = vpack.c.b16 %v1040, %v1039
    %v1393 = vpack.c.b16 %v1042, %v1041
    %v1394 = vpack.c.b16 %v1044, %v1043
    %v1395 = vpack.c.b16 %v1046, %v1045
    %v1396 = vpack.c.b16 %v1048, %v1047
    %v1397 = vpack.c.b16 %v1050, %v1049
    %v1398 = vpack.c.b16 %v1052, %v1051
    %v1399 = vpack.c.b16 %v1054, %v1053
    %v1400 = vpack.c.b16 %v1056, %v1055
    %v1401 = vpack.c.b16 %v1058, %v1057
    %v1402 = vpack.c.b16 %v1060, %v1059
    %v1403 = vpack.c.b16 %v1062, %v1061
    %v1404 = vpack.c.b16 %v1064, %v1063
    %v1405 = vpack.c.b16 %v1066, %v1065
    %v1406 = vpack.c.b16 %v1068, %v1067
    %v1407 = vpack.c.b16 %v1070, %v1069
    %v1408 = vpack.c.b16 %v1072, %v1071
    %v1409 = vpack.c.b16 %v1074, %v1073
    %v1410 = vpack.c.b16 %v1076, %v1075
    %v1411 = vpack.c.b16 %v1078, %v1077
    %v1412 = vpack.c.b16 %v1080, %v1079
    %v1413 = vpack.c.b16 %v1082, %v1081
    %v1414 = vpack.c.b16 %v1084, %v1083
    %v1415 = vpack.c.b16 %v1086, %v1085
    %v1416 = vpack.c.b16 %v1088, %v1087
    %v1417 = vpack.c.b16 %v1090, %v1089
    %v1418 = vpack.c.b16 %v1092, %v1091
    %v1419 = vpack.c.b16 %v1094, %v1093
    %v1420 = vpack.c.b16 %v1096, %v1095
    %v1421 = vpack.c.b16 %v1098, %v1097
    %v1422 = vpack.c.b16 %v1100, %v1099
    %v1423 = vpack.c.b16 %v1102, %v1101
    %v1424 = vpack.c.b16 %v1104, %v1103
    %v1425 = vpack.c.b16 %v1106, %v1105
    %v1426 = vpack.c.b16 %v1108, %v1107
    %v1427 = vpack.c.b16 %v1110, %v1109
    %v1428 = vpack.c.b16 %v1112, %v1111
    %v1429 = vpack.c.b16 %v1114, %v1113
    %v1430 = vpack.c.b16 %v1116, %v1115
    %v1431 = vpack.c.b16 %v1118, %v1117
    %v1432 = vpack.c.b16 %v1120, %v1119
    %v1433 = vpack.c.b16 %v1122, %v1121
    %v1434 = vpack.c.b16 %v1124, %v1123
    %v1435 = vpack.c.b16 %v1126, %v1125
    %v1436 = vpack.c.b16 %v1128, %v1127
    %v1437 = vpack.c.b16 %v1130, %v1129
    %v1438 = vpack.c.b16 %v1132, %v1131
    %v1439 = vpack.c.b16 %v1134, %v1133
    %v1440 = vpack.c.b16 %v1136, %v1135
    %v1441 = vpack.c.b16 %v1138, %v1137
    %v1442 = vpack.c.b16 %v1140, %v1139
    %v1443 = vpack.c.b16 %v1142, %v1141
    %v1444 = vpack.c.b16 %v1144, %v1143
    %v1445 = vpack.c.b16 %v1146, %v1145
    %v1446 = vpack.c.b16 %v1148, %v1147
    %v1447 = vpack.c.b16 %v1150, %v1149
    %v1448 = vpack.c.b16 %v1152, %v1151
    %v1449 = vpack.c.b16 %v1154, %v1153
    %v1450 = vpack.c.b16 %v1156, %v1155
    %v1451 = vpack.c.b16 %v1158, %v1157
    %v1452 = vpack.c.b16 %v1160, %v1159
    %v1453 = vpack.c.b16 %v1162, %v1161
    %v1454 = vpack.c.b16 %v1164, %v1163
    %v1455 = vpack.c.b16 %v1166, %v1165
    %v1456 = vpack.c.b16 %v1168, %v1167
    %v1457 = vpack.c.b16 %v1170, %v1169
    %v1458 = vpack.c.b16 %v1172, %v1171
    %v1459 = vpack.c.b16 %v1174, %v1173
    %v1460 = vpack.c.b16 %v1176, %v1175
    %v1461 = vpack.c.b16 %v1178, %v1177
    %v1462 = vpack.c.b16 %v1180, %v1179
    %v1463 = vpack.c.b16 %v1182, %v1181
    %v1464 = vpack.c.b16 %v1184, %v1183
    %v1465 = vpack.c.b16 %v1186, %v1185
    %v1466 = vpack.c.b16 %v1188, %v1187
    %v1467 = vpack.c.b16 %v1190, %v1189
    %v1468 = vpack.c.b16 %v1192, %v1191
    %v1469 = vpack.c.b16 %v1194, %v1193
    %v1470 = vpack.c.b16 %v1196, %v1195
    %v1471 = vpack.c.b16 %v1198, %v1197
    %v1472 = vpack.c.b16 %v1200, %v1199
    %v1473 = vpack.c.b16 %v1202, %v1201
    %v1474 = vpack.c.b16 %v1204, %v1203
    %v1475 = vpack.c.b16 %v1206, %v1205
    %v1476 = vpack.c.b16 %v1208, %v1207
    %v1477 = vpack.c.b16 %v1210, %v1209
    %v1478 = vpack.c.b16 %v1212, %v1211
    %v1479 = vpack.c.b16 %v1214, %v1213
    %v1480 = vpack.c.b16 %v1216, %v1215
    %v1481 = vpack.c.b16 %v1218, %v1217
    %v1482 = vpack.c.b16 %v1220, %v1219
    %v1483 = vpack.c.b16 %v1222, %v1221
    %v1484 = vpack.c.b16 %v1224, %v1223
    %v1485 = vpack.c.b16 %v1226, %v1225
    %v1486 = vpack.c.b16 %v1228, %v1227
    %v1487 = vpack.c.b16 %v1230, %v1229
    %v1488 = vpack.c.b16 %v1232, %v1231
    %v1489 = vpack.c.b16 %v1234, %v1233
    %v1490 = vpack.c.b16 %v1236, %v1235
    %v1491 = vpack.c.b16 %v1238, %v1237
    %v1492 = vpack.c.b16 %v1240, %v1239
    %v1493 = vpack.c.b16 %v1242, %v1241
    %v1494 = vpack.c.b16 %v1244, %v1243
    %v1495 = vpack.c.b16 %v1246, %v1245
    %v1496 = vpack.c.b16 %v1248, %v1247
    %v1497 = vpack.c.b16 %v1250, %v1249
    %v1498 = vpack.c.b16 %v1252, %v1251
    %v1499 = vpack.c.b16 %v1254, %v1253
    %v1500 = vpack.c.b16 %v1256, %v1255
    %v1501 = vpack.c.b16 %v1258, %v1257
    %v1502 = vpack.c.b16 %v1260, %v1259
    %v1503 = vpack.c.b16 %v1262, %v1261
    %v1504 = vpack.c.b16 %v1264, %v1263
    %v1505 = vpack.c.b16 %v1266, %v1265
    %v1506 = vpack.c.b16 %v1268, %v1267
    %v1507 = vpack.c.b16 %v1270, %v1269
    %v1508 = vpack.c.b16 %v1272, %v1271
    %v1509 = vpack.c.b16 %v1274, %v1273
    %v1510 = vpack.c.b16 %v1276, %v1275
    %v1511 = vpack.c.b16 %v1278, %v1277
    %v1512 = vpack.c.b16 %v1280, %v1279
    %v1513 = vpack.c.b16 %v1282, %v1281
    %v1514 = vpack.c.b16 %v1284, %v1283
    %v1515 = vpack.c.b16 %v1286, %v1285
    %v1516 = vpack.c.b16 %v1288, %v1287
    %v1517 = vpack.c.b16 %v1290, %v1289
    %v1518 = vpack.c.b16 %v1292, %v1291
    %v1519 = vpack.c.b16 %v1294, %v1293
    %v1520 = vpack.c.b16 %v1296, %v1295
    %v1521 = vpack.c.b16 %v1298, %v1297
    %v1522 = vpack.c.b16 %v1300, %v1299
    %v1523 = vpack.c.b16 %v1302, %v1301
    %v1524 = vpack.c.b16 %v1304, %v1303
    %v1525 = vpack.c.b16 %v1306, %v1305
    %v1526 = vpack.c.b16 %v1308, %v1307
    %v1527 = vpack.c.b16 %v1310, %v1309
    %v1528 = vpack.c.b16 %v1312, %v1311
    %v1529 = vpack.c.b16 %v1314, %v1313
    %v1530 = vpack.c.b16 %v1316, %v1315
    %v1531 = vpack.c.b16 %v1318, %v1317
    %v1532 = vpack.c.b16 %v1320, %v1319
    %v1533 = vpack.c.b16 %v1322, %v1321
    %v1534 = vpack.c.b16 %v1324, %v1323
    %v1535 = vpack.c.b16 %v1326, %v1325
    %v1536 = vpack.c.b16 %v1328, %v1327
    %v1537 = vpack.c.b16 %v1330, %v1329
    %v1538 = vpack.c.b16 %v1332, %v1331
    %v1539 = vpack.c.b16 %v1334, %v1333
    %v1540 = vpack.c.b16 %v1336, %v1335
    %v1541 = vpack.c.b16 %v1338, %v1337
    %v1542 = vpack.c.b16 %v1340, %v1339
    %v1543 = vpack.c.b16 %v1342, %v1341
    %v1544 = vpack.c.b16 %v1344, %v1343
    %v1545 = vpack.c.b16 %v1346, %v1345
    %v1546 = vpack.c.b16 %v1348, %v1347
    %v1547 = vpack.c.b16 %v1350, %v1349
    %v1548 = vpack.c.b16 %v1352, %v1351
    %v1549 = vpack.c.b16 %v1354, %v1353
    %v1550 = vpack.c.b16 %v1356, %v1355
    %v1551 = vpack.c.b16 %v1358, %v1357
    %v1552 = vpack.c.b16 %v1360, %v1359
    %1745 = vmatpush.bf16.msra.mxu0 %v1368
    %1746 = vmatpush.bf16.msra.mxu0 %v1367
    %1747 = vmatpush.bf16.msra.mxu0 %v1366
    %1748 = vmatpush.bf16.msra.mxu0 %v1365
    %1749 = vmatpush.bf16.msra.mxu0 %v1364
    %1750 = vmatpush.bf16.msra.mxu0 %v1363
    %1751 = vmatpush.bf16.msra.mxu0 %v1362
    %1752 = vmatpush.bf16.msra.mxu0 %v1361
    %1753 = vmatmul.bf16.gmra.mxu0 %v545
    %v1754 = vpop.f32.mrf.mxu0
    %v1755 = vadd.f32 %v507, %v1754
    %v1756 = vpop.f32.mrf.mxu0
    %1757 = vdwg.mxu0
    %1758 = vmatpush.bf16.msra.mxu0 %v1376
    %1759 = vmatpush.bf16.msra.mxu0 %v1375
    %1760 = vmatpush.bf16.msra.mxu0 %v1374
    %1761 = vmatpush.bf16.msra.mxu0 %v1373
    %1762 = vmatpush.bf16.msra.mxu0 %v1372
    %1763 = vmatpush.bf16.msra.mxu0 %v1371
    %1764 = vmatpush.bf16.msra.mxu0 %v1370
    %1765 = vmatpush.bf16.msra.mxu0 %v1369
    %1766 = vmatmul.bf16.gmra.mxu0 %v546
    %v1767 = vpop.f32.mrf.mxu0
    %v1768 = vadd.f32 %v1755, %v1767
    %v1769 = vpop.f32.mrf.mxu0
    %1770 = vdwg.mxu0
    %1771 = vmatpush.bf16.msra.mxu0 %v1384
    %1772 = vmatpush.bf16.msra.mxu0 %v1383
    %1773 = vmatpush.bf16.msra.mxu0 %v1382
    %1774 = vmatpush.bf16.msra.mxu0 %v1381
    %1775 = vmatpush.bf16.msra.mxu0 %v1380
    %1776 = vmatpush.bf16.msra.mxu0 %v1379
    %1777 = vmatpush.bf16.msra.mxu0 %v1378
    %1778 = vmatpush.bf16.msra.mxu0 %v1377
    %1779 = vmatmul.bf16.gmra.mxu0 %v547
    %v1780 = vpop.f32.mrf.mxu0
    %v1781 = vadd.f32 %v1768, %v1780
    %v1782 = vpop.f32.mrf.mxu0
    %1783 = vdwg.mxu0
    %1784 = vmatpush.bf16.msra.mxu0 %v1392
    %1785 = vmatpush.bf16.msra.mxu0 %v1391
    %1786 = vmatpush.bf16.msra.mxu0 %v1390
    %1787 = vmatpush.bf16.msra.mxu0 %v1389
    %1788 = vmatpush.bf16.msra.mxu0 %v1388
    %1789 = vmatpush.bf16.msra.mxu0 %v1387
    %1790 = vmatpush.bf16.msra.mxu0 %v1386
    %1791 = vmatpush.bf16.msra.mxu0 %v1385
    %1792 = vmatmul.bf16.gmra.mxu0 %v548
    %v1793 = vpop.f32.mrf.mxu0
    %v1794 = vadd.f32 %v1781, %v1793
    %v1795 = vpop.f32.mrf.mxu0
    %1796 = vdwg.mxu0
    %1797 = vmatpush.bf16.msra.mxu0 %v1400
    %1798 = vmatpush.bf16.msra.mxu0 %v1399
    %1799 = vmatpush.bf16.msra.mxu0 %v1398
    %1800 = vmatpush.bf16.msra.mxu0 %v1397
    %1801 = vmatpush.bf16.msra.mxu0 %v1396
    %1802 = vmatpush.bf16.msra.mxu0 %v1395
    %1803 = vmatpush.bf16.msra.mxu0 %v1394
    %1804 = vmatpush.bf16.msra.mxu0 %v1393
    %1805 = vmatmul.bf16.gmra.mxu0 %v549
    %v1806 = vpop.f32.mrf.mxu0
    %v1807 = vadd.f32 %v1794, %v1806
    %v1808 = vpop.f32.mrf.mxu0
    %1809 = vdwg.mxu0
    %1810 = vmatpush.bf16.msra.mxu0 %v1408
    %1811 = vmatpush.bf16.msra.mxu0 %v1407
    %1812 = vmatpush.bf16.msra.mxu0 %v1406
    %1813 = vmatpush.bf16.msra.mxu0 %v1405
    %1814 = vmatpush.bf16.msra.mxu0 %v1404
    %1815 = vmatpush.bf16.msra.mxu0 %v1403
    %1816 = vmatpush.bf16.msra.mxu0 %v1402
    %1817 = vmatpush.bf16.msra.mxu0 %v1401
    %1818 = vmatmul.bf16.gmra.mxu0 %v550
    %v1819 = vpop.f32.mrf.mxu0
    %v1820 = vadd.f32 %v1807, %v1819
    %v1821 = vpop.f32.mrf.mxu0
    %1822 = vdwg.mxu0
    %1823 = vmatpush.bf16.msra.mxu0 %v1416
    %1824 = vmatpush.bf16.msra.mxu0 %v1415
    %1825 = vmatpush.bf16.msra.mxu0 %v1414
    %1826 = vmatpush.bf16.msra.mxu0 %v1413
    %1827 = vmatpush.bf16.msra.mxu0 %v1412
    %1828 = vmatpush.bf16.msra.mxu0 %v1411
    %1829 = vmatpush.bf16.msra.mxu0 %v1410
    %1830 = vmatpush.bf16.msra.mxu0 %v1409
    %1831 = vmatmul.bf16.gmra.mxu0 %v551
    %v1832 = vpop.f32.mrf.mxu0
    %v1833 = vadd.f32 %v1820, %v1832
    %v1834 = vpop.f32.mrf.mxu0
    %1835 = vdwg.mxu0
    %1836 = vmatpush.bf16.msra.mxu0 %v1424
    %1837 = vmatpush.bf16.msra.mxu0 %v1423
    %1838 = vmatpush.bf16.msra.mxu0 %v1422
    %1839 = vmatpush.bf16.msra.mxu0 %v1421
    %1840 = vmatpush.bf16.msra.mxu0 %v1420
    %1841 = vmatpush.bf16.msra.mxu0 %v1419
    %1842 = vmatpush.bf16.msra.mxu0 %v1418
    %1843 = vmatpush.bf16.msra.mxu0 %v1417
    %1844 = vmatmul.bf16.gmra.mxu0 %v552
    %v1845 = vpop.f32.mrf.mxu0
    %v1846 = vadd.f32 %v1833, %v1845
    %v1847 = vpop.f32.mrf.mxu0
    %1848 = vdwg.mxu0
    %1849 = vmatpush.bf16.msra.mxu0 %v1432
    %1850 = vmatpush.bf16.msra.mxu0 %v1431
    %1851 = vmatpush.bf16.msra.mxu0 %v1430
    %1852 = vmatpush.bf16.msra.mxu0 %v1429
    %1853 = vmatpush.bf16.msra.mxu0 %v1428
    %1854 = vmatpush.bf16.msra.mxu0 %v1427
    %1855 = vmatpush.bf16.msra.mxu0 %v1426
    %1856 = vmatpush.bf16.msra.mxu0 %v1425
    %1857 = vmatmul.bf16.gmra.mxu0 %v553
    %v1858 = vpop.f32.mrf.mxu0
    %v1859 = vadd.f32 %v1846, %v1858
    %v1860 = vpop.f32.mrf.mxu0
    %1861 = vdwg.mxu0
    %1862 = vmatpush.bf16.msra.mxu0 %v1440
    %1863 = vmatpush.bf16.msra.mxu0 %v1439
    %1864 = vmatpush.bf16.msra.mxu0 %v1438
    %1865 = vmatpush.bf16.msra.mxu0 %v1437
    %1866 = vmatpush.bf16.msra.mxu0 %v1436
    %1867 = vmatpush.bf16.msra.mxu0 %v1435
    %1868 = vmatpush.bf16.msra.mxu0 %v1434
    %1869 = vmatpush.bf16.msra.mxu0 %v1433
    %1870 = vmatmul.bf16.gmra.mxu0 %v554
    %v1871 = vpop.f32.mrf.mxu0
    %v1872 = vadd.f32 %v1859, %v1871
    %v1873 = vpop.f32.mrf.mxu0
    %1874 = vdwg.mxu0
    %1875 = vmatpush.bf16.msra.mxu0 %v1448
    %1876 = vmatpush.bf16.msra.mxu0 %v1447
    %1877 = vmatpush.bf16.msra.mxu0 %v1446
    %1878 = vmatpush.bf16.msra.mxu0 %v1445
    %1879 = vmatpush.bf16.msra.mxu0 %v1444
    %1880 = vmatpush.bf16.msra.mxu0 %v1443
    %1881 = vmatpush.bf16.msra.mxu0 %v1442
    %1882 = vmatpush.bf16.msra.mxu0 %v1441
    %1883 = vmatmul.bf16.gmra.mxu0 %v555
    %v1884 = vpop.f32.mrf.mxu0
    %v1885 = vadd.f32 %v1872, %v1884
    %v1886 = vpop.f32.mrf.mxu0
    %1887 = vdwg.mxu0
    %1888 = vmatpush.bf16.msra.mxu0 %v1456
    %1889 = vmatpush.bf16.msra.mxu0 %v1455
    %1890 = vmatpush.bf16.msra.mxu0 %v1454
    %1891 = vmatpush.bf16.msra.mxu0 %v1453
    %1892 = vmatpush.bf16.msra.mxu0 %v1452
    %1893 = vmatpush.bf16.msra.mxu0 %v1451
    %1894 = vmatpush.bf16.msra.mxu0 %v1450
    %1895 = vmatpush.bf16.msra.mxu0 %v1449
    %1896 = vmatmul.bf16.gmra.mxu0 %v556
    %v1897 = vpop.f32.mrf.mxu0
    %v1898 = vadd.f32 %v1885, %v1897
    %v1899 = vpop.f32.mrf.mxu0
    %1900 = vdwg.mxu0
    %1901 = vmatpush.bf16.msra.mxu0 %v1464
    %1902 = vmatpush.bf16.msra.mxu0 %v1463
    %1903 = vmatpush.bf16.msra.mxu0 %v1462
    %1904 = vmatpush.bf16.msra.mxu0 %v1461
    %1905 = vmatpush.bf16.msra.mxu0 %v1460
    %1906 = vmatpush.bf16.msra.mxu0 %v1459
    %1907 = vmatpush.bf16.msra.mxu0 %v1458
    %1908 = vmatpush.bf16.msra.mxu0 %v1457
    %1909 = vmatmul.bf16.gmra.mxu0 %v557
    %v1910 = vpop.f32.mrf.mxu0
    %v1911 = vadd.f32 %v1898, %v1910
    %v1912 = vpop.f32.mrf.mxu0
    %1913 = vdwg.mxu0
    %1914 = vmatpush.bf16.msra.mxu0 %v1472
    %1915 = vmatpush.bf16.msra.mxu0 %v1471
    %1916 = vmatpush.bf16.msra.mxu0 %v1470
    %1917 = vmatpush.bf16.msra.mxu0 %v1469
    %1918 = vmatpush.bf16.msra.mxu0 %v1468
    %1919 = vmatpush.bf16.msra.mxu0 %v1467
    %1920 = vmatpush.bf16.msra.mxu0 %v1466
    %1921 = vmatpush.bf16.msra.mxu0 %v1465
    %1922 = vmatmul.bf16.gmra.mxu0 %v558
    %v1923 = vpop.f32.mrf.mxu0
    %v1924 = vadd.f32 %v1911, %v1923
    %v1925 = vpop.f32.mrf.mxu0
    %1926 = vdwg.mxu0
    %1927 = vmatpush.bf16.msra.mxu0 %v1480
    %1928 = vmatpush.bf16.msra.mxu0 %v1479
    %1929 = vmatpush.bf16.msra.mxu0 %v1478
    %1930 = vmatpush.bf16.msra.mxu0 %v1477
    %1931 = vmatpush.bf16.msra.mxu0 %v1476
    %1932 = vmatpush.bf16.msra.mxu0 %v1475
    %1933 = vmatpush.bf16.msra.mxu0 %v1474
    %1934 = vmatpush.bf16.msra.mxu0 %v1473
    %1935 = vmatmul.bf16.gmra.mxu0 %v559
    %v1936 = vpop.f32.mrf.mxu0
    %v1937 = vadd.f32 %v1924, %v1936
    %v1938 = vpop.f32.mrf.mxu0
    %1939 = vdwg.mxu0
    %1940 = vmatpush.bf16.msra.mxu0 %v1488
    %1941 = vmatpush.bf16.msra.mxu0 %v1487
    %1942 = vmatpush.bf16.msra.mxu0 %v1486
    %1943 = vmatpush.bf16.msra.mxu0 %v1485
    %1944 = vmatpush.bf16.msra.mxu0 %v1484
    %1945 = vmatpush.bf16.msra.mxu0 %v1483
    %1946 = vmatpush.bf16.msra.mxu0 %v1482
    %1947 = vmatpush.bf16.msra.mxu0 %v1481
    %1948 = vmatmul.bf16.gmra.mxu0 %v560
    %v1949 = vpop.f32.mrf.mxu0
    %v1950 = vadd.f32 %v1937, %v1949
    %v1951 = vpop.f32.mrf.mxu0
    %1952 = vdwg.mxu0
    %1953 = vmatpush.bf16.msra.mxu0 %v1496
    %1954 = vmatpush.bf16.msra.mxu0 %v1495
    %1955 = vmatpush.bf16.msra.mxu0 %v1494
    %1956 = vmatpush.bf16.msra.mxu0 %v1493
    %1957 = vmatpush.bf16.msra.mxu0 %v1492
    %1958 = vmatpush.bf16.msra.mxu0 %v1491
    %1959 = vmatpush.bf16.msra.mxu0 %v1490
    %1960 = vmatpush.bf16.msra.mxu0 %v1489
    %1961 = vmatmul.bf16.gmra.mxu0 %v561
    %v1962 = vpop.f32.mrf.mxu0
    %v1963 = vadd.f32 %v1950, %v1962
    %v1964 = vpop.f32.mrf.mxu0
    %1965 = vdwg.mxu0
    %1966 = vmatpush.bf16.msra.mxu0 %v1504
    %1967 = vmatpush.bf16.msra.mxu0 %v1503
    %1968 = vmatpush.bf16.msra.mxu0 %v1502
    %1969 = vmatpush.bf16.msra.mxu0 %v1501
    %1970 = vmatpush.bf16.msra.mxu0 %v1500
    %1971 = vmatpush.bf16.msra.mxu0 %v1499
    %1972 = vmatpush.bf16.msra.mxu0 %v1498
    %1973 = vmatpush.bf16.msra.mxu0 %v1497
    %1974 = vmatmul.bf16.gmra.mxu0 %v562
    %v1975 = vpop.f32.mrf.mxu0
    %v1976 = vadd.f32 %v1963, %v1975
    %v1977 = vpop.f32.mrf.mxu0
    %1978 = vdwg.mxu0
    %1979 = vmatpush.bf16.msra.mxu0 %v1512
    %1980 = vmatpush.bf16.msra.mxu0 %v1511
    %1981 = vmatpush.bf16.msra.mxu0 %v1510
    %1982 = vmatpush.bf16.msra.mxu0 %v1509
    %1983 = vmatpush.bf16.msra.mxu0 %v1508
    %1984 = vmatpush.bf16.msra.mxu0 %v1507
    %1985 = vmatpush.bf16.msra.mxu0 %v1506
    %1986 = vmatpush.bf16.msra.mxu0 %v1505
    %1987 = vmatmul.bf16.gmra.mxu0 %v563
    %v1988 = vpop.f32.mrf.mxu0
    %v1989 = vadd.f32 %v1976, %v1988
    %v1990 = vpop.f32.mrf.mxu0
    %1991 = vdwg.mxu0
    %1992 = vmatpush.bf16.msra.mxu0 %v1520
    %1993 = vmatpush.bf16.msra.mxu0 %v1519
    %1994 = vmatpush.bf16.msra.mxu0 %v1518
    %1995 = vmatpush.bf16.msra.mxu0 %v1517
    %1996 = vmatpush.bf16.msra.mxu0 %v1516
    %1997 = vmatpush.bf16.msra.mxu0 %v1515
    %1998 = vmatpush.bf16.msra.mxu0 %v1514
    %1999 = vmatpush.bf16.msra.mxu0 %v1513
    %2000 = vmatmul.bf16.gmra.mxu0 %v564
    %v2001 = vpop.f32.mrf.mxu0
    %v2002 = vadd.f32 %v1989, %v2001
    %v2003 = vpop.f32.mrf.mxu0
    %2004 = vdwg.mxu0
    %2005 = vmatpush.bf16.msra.mxu0 %v1528
    %2006 = vmatpush.bf16.msra.mxu0 %v1527
    %2007 = vmatpush.bf16.msra.mxu0 %v1526
    %2008 = vmatpush.bf16.msra.mxu0 %v1525
    %2009 = vmatpush.bf16.msra.mxu0 %v1524
    %2010 = vmatpush.bf16.msra.mxu0 %v1523
    %2011 = vmatpush.bf16.msra.mxu0 %v1522
    %2012 = vmatpush.bf16.msra.mxu0 %v1521
    %2013 = vmatmul.bf16.gmra.mxu0 %v565
    %v2014 = vpop.f32.mrf.mxu0
    %v2015 = vadd.f32 %v2002, %v2014
    %v2016 = vpop.f32.mrf.mxu0
    %2017 = vdwg.mxu0
    %2018 = vmatpush.bf16.msra.mxu0 %v1536
    %2019 = vmatpush.bf16.msra.mxu0 %v1535
    %2020 = vmatpush.bf16.msra.mxu0 %v1534
    %2021 = vmatpush.bf16.msra.mxu0 %v1533
    %2022 = vmatpush.bf16.msra.mxu0 %v1532
    %2023 = vmatpush.bf16.msra.mxu0 %v1531
    %2024 = vmatpush.bf16.msra.mxu0 %v1530
    %2025 = vmatpush.bf16.msra.mxu0 %v1529
    %2026 = vmatmul.bf16.gmra.mxu0 %v566
    %v2027 = vpop.f32.mrf.mxu0
    %v2028 = vadd.f32 %v2015, %v2027
    %v2029 = vpop.f32.mrf.mxu0
    %2030 = vdwg.mxu0
    %2031 = vmatpush.bf16.msra.mxu0 %v1544
    %2032 = vmatpush.bf16.msra.mxu0 %v1543
    %2033 = vmatpush.bf16.msra.mxu0 %v1542
    %2034 = vmatpush.bf16.msra.mxu0 %v1541
    %2035 = vmatpush.bf16.msra.mxu0 %v1540
    %2036 = vmatpush.bf16.msra.mxu0 %v1539
    %2037 = vmatpush.bf16.msra.mxu0 %v1538
    %2038 = vmatpush.bf16.msra.mxu0 %v1537
    %2039 = vmatmul.bf16.gmra.mxu0 %v567
    %v2040 = vpop.f32.mrf.mxu0
    %v2041 = vadd.f32 %v2028, %v2040
    %v2042 = vpop.f32.mrf.mxu0
    %2043 = vdwg.mxu0
    %2044 = vmatpush.bf16.msra.mxu0 %v1552
    %2045 = vmatpush.bf16.msra.mxu0 %v1551
    %2046 = vmatpush.bf16.msra.mxu0 %v1550
    %2047 = vmatpush.bf16.msra.mxu0 %v1549
    %2048 = vmatpush.bf16.msra.mxu0 %v1548
    %2049 = vmatpush.bf16.msra.mxu0 %v1547
    %2050 = vmatpush.bf16.msra.mxu0 %v1546
    %2051 = vmatpush.bf16.msra.mxu0 %v1545
    %2052 = vmatmul.bf16.gmra.mxu0 %v568
    %v2053 = vpop.f32.mrf.mxu0
    %v2054 = vadd.f32 %v2041, %v2053
    %v2055 = vpop.f32.mrf.mxu0
    %2056 = vdwg.mxu0
    %v2057 = vxor.u32 %v2054, 2147483648
    %v2058 = vmul.f32 %v2057, 1.442695
    %v2059 = vpow.pop %v2058
    %v2060 = vadd.f32 %v2059, 1.0
    %v2061 = vrcp.pop %v2060
    %v2062 = vmul.f32 %v2060, %v2061
    %v2063 = vsub.f32 1.0, %v2062
    %v2064 = vmul.f32 %v2061, %v2063
    %v2065 = vadd.f32 %v2061, %v2064
    %vm2066 = vweird.f32 %v2060
    %vm2067 = vweird.f32 %v2061
    %vm2068 = vmor %vm2066, %vm2067
    %v2069 = vsel %vm2068, %v2061, %v2065
    %v2070 = vand.u32 2147483647, %v2060
    %vm2071 = vcmp.eq.f32.partialorder %v2070, 8.507059e+37
    %v2072 = vand.u32 %v2060, 2147483648
    %v2073 = vor.u32 1.1754944e-38, %v2072
    %v2074 = vsel %vm2071, %v2073, %v2069
    %v2075 = vmul.f32 1.0, %v2074
    %v2076 = vpack.c.bf16 %v2075, %v2075
    %v2077 = vld [vmem:[#allocation7] sm:$0xf]
    %v2078 = vld [vmem:[#allocation7 + $0x4] sm:$0xf]
    %v2079 = vld [vmem:[#allocation7 + $0x8] sm:$0xf]
    %v2080 = vld [vmem:[#allocation7 + $0xc] sm:$0xf]
    %v2081 = vld [vmem:[#allocation7 + $0x10] sm:$0xf]
    %v2082 = vld [vmem:[#allocation7 + $0x14] sm:$0xf]
    %v2083 = vld [vmem:[#allocation7 + $0x18] sm:$0xf]
    %v2084 = vld [vmem:[#allocation7 + $0x1c] sm:$0xf]
    %v2085 = vld [vmem:[#allocation7 + $0x20] sm:$0xf]
    %v2086 = vld [vmem:[#allocation7 + $0x24] sm:$0xf]
    %v2087 = vld [vmem:[#allocation7 + $0x28] sm:$0xf]
    %v2088 = vld [vmem:[#allocation7 + $0x2c] sm:$0xf]
    %v2089 = vld [vmem:[#allocation7 + $0x30] sm:$0xf]
    %v2090 = vld [vmem:[#allocation7 + $0x34] sm:$0xf]
    %v2091 = vld [vmem:[#allocation7 + $0x38] sm:$0xf]
    %v2092 = vld [vmem:[#allocation7 + $0x3c] sm:$0xf]
    %v2093 = vld [vmem:[%s4] sm:$0x1]
    %v2095 = vperm.slane %v2093, 0
    %v2113 = vunpack.c.l.b16 %v2077
    %v2114 = vunpack.c.l.b16 %v2078
    %v2115 = vunpack.c.l.b16 %v2079
    %v2116 = vunpack.c.l.b16 %v2080
    %v2117 = vunpack.c.l.b16 %v2081
    %v2118 = vunpack.c.l.b16 %v2082
    %v2119 = vunpack.c.l.b16 %v2083
    %v2120 = vunpack.c.l.b16 %v2084
    %v2121 = vunpack.c.l.b16 %v2085
    %v2122 = vunpack.c.l.b16 %v2086
    %v2123 = vunpack.c.l.b16 %v2087
    %v2124 = vunpack.c.l.b16 %v2088
    %v2125 = vunpack.c.l.b16 %v2089
    %v2126 = vunpack.c.l.b16 %v2090
    %v2127 = vunpack.c.l.b16 %v2091
    %v2128 = vunpack.c.l.b16 %v2092
    %v2129 = vpack.c.b16 %v2114, %v2113
    %v2130 = vpack.c.b16 %v2116, %v2115
    %v2131 = vpack.c.b16 %v2118, %v2117
    %v2132 = vpack.c.b16 %v2120, %v2119
    %v2133 = vpack.c.b16 %v2122, %v2121
    %v2134 = vpack.c.b16 %v2124, %v2123
    %v2135 = vpack.c.b16 %v2126, %v2125
    %v2136 = vpack.c.b16 %v2128, %v2127
    %2145 = vmatpush.bf16.msra.mxu0 %v2136
    %2146 = vmatpush.bf16.msra.mxu0 %v2135
    %2147 = vmatpush.bf16.msra.mxu0 %v2134
    %2148 = vmatpush.bf16.msra.mxu0 %v2133
    %2149 = vmatpush.bf16.msra.mxu0 %v2132
    %2150 = vmatpush.bf16.msra.mxu0 %v2131
    %2151 = vmatpush.bf16.msra.mxu0 %v2130
    %2152 = vmatpush.bf16.msra.mxu0 %v2129
    %2153 = vmatmul.bf16.gmra.mxu0 %v2076
    %v2154 = vpop.f32.mrf.mxu0
    %v2155 = vadd.f32 %v2095, %v2154
    %v2156 = vpop.f32.mrf.mxu0
    %2157 = vdwg.mxu0
    %v2158 = vxor.u32 %v2155, 2147483648
    %v2159 = vmul.f32 %v2158, 1.442695
    %v2160 = vpow.pop %v2159
    %v2161 = vadd.f32 %v2160, 1.0
    %v2162 = vrcp.pop %v2161
    %v2163 = vmul.f32 %v2161, %v2162
    %v2164 = vsub.f32 1.0, %v2163
    %v2165 = vmul.f32 %v2162, %v2164
    %v2166 = vadd.f32 %v2162, %v2165
    %vm2167 = vweird.f32 %v2161
    %vm2168 = vweird.f32 %v2162
    %vm2169 = vmor %vm2167, %vm2168
    %v2170 = vsel %vm2169, %v2162, %v2166
    %v2171 = vand.u32 2147483647, %v2161
    %vm2172 = vcmp.eq.f32.partialorder %v2171, 8.507059e+37
    %v2173 = vand.u32 %v2161, 2147483648
    %v2174 = vor.u32 1.1754944e-38, %v2173
    %v2175 = vsel %vm2172, %v2174, %v2170
    %v2176 = vmul.f32 1.0, %v2175
    %v2177 = vpack.c.bf16 %v2176, %v2176
    %v2178 = vld [vmem:[#allocation8] sm:$0xf]
    %v2179 = vld [vmem:[#allocation8 + $0x4] sm:$0xf]
    %v2180 = vld [vmem:[#allocation8 + $0x8] sm:$0xf]
    %v2181 = vld [vmem:[#allocation8 + $0xc] sm:$0xf]
    %v2182 = vld [vmem:[#allocation8 + $0x10] sm:$0xf]
    %v2183 = vld [vmem:[#allocation8 + $0x14] sm:$0xf]
    %v2184 = vld [vmem:[#allocation8 + $0x18] sm:$0xf]
    %v2185 = vld [vmem:[#allocation8 + $0x1c] sm:$0xf]
    %v2186 = vld [vmem:[#allocation8 + $0x20] sm:$0xf]
    %v2187 = vld [vmem:[#allocation8 + $0x24] sm:$0xf]
    %v2188 = vld [vmem:[#allocation8 + $0x28] sm:$0xf]
    %v2189 = vld [vmem:[#allocation8 + $0x2c] sm:$0xf]
    %v2190 = vld [vmem:[#allocation8 + $0x30] sm:$0xf]
    %v2191 = vld [vmem:[#allocation8 + $0x34] sm:$0xf]
    %v2192 = vld [vmem:[#allocation8 + $0x38] sm:$0xf]
    %v2193 = vld [vmem:[#allocation8 + $0x3c] sm:$0xf]
    %v2194 = vld [vmem:[%s6] sm:$0x1]
    %v2196 = vperm.slane %v2194, 0
    %v2214 = vunpack.c.l.b16 %v2178
    %v2215 = vunpack.c.l.b16 %v2179
    %v2216 = vunpack.c.l.b16 %v2180
    %v2217 = vunpack.c.l.b16 %v2181
    %v2218 = vunpack.c.l.b16 %v2182
    %v2219 = vunpack.c.l.b16 %v2183
    %v2220 = vunpack.c.l.b16 %v2184
    %v2221 = vunpack.c.l.b16 %v2185
    %v2222 = vunpack.c.l.b16 %v2186
    %v2223 = vunpack.c.l.b16 %v2187
    %v2224 = vunpack.c.l.b16 %v2188
    %v2225 = vunpack.c.l.b16 %v2189
    %v2226 = vunpack.c.l.b16 %v2190
    %v2227 = vunpack.c.l.b16 %v2191
    %v2228 = vunpack.c.l.b16 %v2192
    %v2229 = vunpack.c.l.b16 %v2193
    %v2230 = vpack.c.b16 %v2215, %v2214
    %v2231 = vpack.c.b16 %v2217, %v2216
    %v2232 = vpack.c.b16 %v2219, %v2218
    %v2233 = vpack.c.b16 %v2221, %v2220
    %v2234 = vpack.c.b16 %v2223, %v2222
    %v2235 = vpack.c.b16 %v2225, %v2224
    %v2236 = vpack.c.b16 %v2227, %v2226
    %v2237 = vpack.c.b16 %v2229, %v2228
    %2246 = vmatpush.bf16.msra.mxu0 %v2237
    %2247 = vmatpush.bf16.msra.mxu0 %v2236
    %2248 = vmatpush.bf16.msra.mxu0 %v2235
    %2249 = vmatpush.bf16.msra.mxu0 %v2234
    %2250 = vmatpush.bf16.msra.mxu0 %v2233
    %2251 = vmatpush.bf16.msra.mxu0 %v2232
    %2252 = vmatpush.bf16.msra.mxu0 %v2231
    %2253 = vmatpush.bf16.msra.mxu0 %v2230
    %2254 = vmatmul.bf16.gmra.mxu0 %v2177
    %v2255 = vpop.f32.mrf.mxu0
    %v2256 = vadd.f32 %v2196, %v2255
    %v2257 = vpop.f32.mrf.mxu0
    %2258 = vdwg.mxu0
    %v2259 = vxor.u32 %v2256, 2147483648
    %v2260 = vmul.f32 %v2259, 1.442695
    %v2261 = vpow.pop %v2260
    %v2262 = vadd.f32 %v2261, 1.0
    %v2263 = vrcp.pop %v2262
    %v2264 = vmul.f32 %v2262, %v2263
    %v2265 = vsub.f32 1.0, %v2264
    %v2266 = vmul.f32 %v2263, %v2265
    %v2267 = vadd.f32 %v2263, %v2266
    %vm2268 = vweird.f32 %v2262
    %vm2269 = vweird.f32 %v2263
    %vm2270 = vmor %vm2268, %vm2269
    %v2271 = vsel %vm2270, %v2263, %v2267
    %v2272 = vand.u32 2147483647, %v2262
    %vm2273 = vcmp.eq.f32.partialorder %v2272, 8.507059e+37
    %v2274 = vand.u32 %v2262, 2147483648
    %v2275 = vor.u32 1.1754944e-38, %v2274
    %v2276 = vsel %vm2273, %v2275, %v2271
    %v2277 = vmul.f32 1.0, %v2276
    %v2278 = vpack.c.bf16 %v2277, %v2277
    %v2279 = vld [vmem:[#allocation10] sm:$0xf]
    %v2280 = vld [vmem:[#allocation10 + $0x4] sm:$0xf]
    %v2281 = vld [vmem:[#allocation10 + $0x8] sm:$0xf]
    %v2282 = vld [vmem:[#allocation10 + $0xc] sm:$0xf]
    %v2283 = vld [vmem:[#allocation10 + $0x10] sm:$0xf]
    %v2284 = vld [vmem:[#allocation10 + $0x14] sm:$0xf]
    %v2285 = vld [vmem:[#allocation10 + $0x18] sm:$0xf]
    %v2286 = vld [vmem:[#allocation10 + $0x1c] sm:$0xf]
    %v2287 = vld [vmem:[#allocation10 + $0x20] sm:$0xf]
    %v2288 = vld [vmem:[#allocation10 + $0x24] sm:$0xf]
    %v2289 = vld [vmem:[#allocation10 + $0x28] sm:$0xf]
    %v2290 = vld [vmem:[#allocation10 + $0x2c] sm:$0xf]
    %v2291 = vld [vmem:[#allocation10 + $0x30] sm:$0xf]
    %v2292 = vld [vmem:[#allocation10 + $0x34] sm:$0xf]
    %v2293 = vld [vmem:[#allocation10 + $0x38] sm:$0xf]
    %v2294 = vld [vmem:[#allocation10 + $0x3c] sm:$0xf]
    %v2295 = vld [vmem:[%s8] sm:$0x1]
    %v2297 = vperm.slane %v2295, 0
    %v2315 = vunpack.c.l.b16 %v2279
    %v2316 = vunpack.c.l.b16 %v2280
    %v2317 = vunpack.c.l.b16 %v2281
    %v2318 = vunpack.c.l.b16 %v2282
    %v2319 = vunpack.c.l.b16 %v2283
    %v2320 = vunpack.c.l.b16 %v2284
    %v2321 = vunpack.c.l.b16 %v2285
    %v2322 = vunpack.c.l.b16 %v2286
    %v2323 = vunpack.c.l.b16 %v2287
    %v2324 = vunpack.c.l.b16 %v2288
    %v2325 = vunpack.c.l.b16 %v2289
    %v2326 = vunpack.c.l.b16 %v2290
    %v2327 = vunpack.c.l.b16 %v2291
    %v2328 = vunpack.c.l.b16 %v2292
    %v2329 = vunpack.c.l.b16 %v2293
    %v2330 = vunpack.c.l.b16 %v2294
    %v2331 = vpack.c.b16 %v2316, %v2315
    %v2332 = vpack.c.b16 %v2318, %v2317
    %v2333 = vpack.c.b16 %v2320, %v2319
    %v2334 = vpack.c.b16 %v2322, %v2321
    %v2335 = vpack.c.b16 %v2324, %v2323
    %v2336 = vpack.c.b16 %v2326, %v2325
    %v2337 = vpack.c.b16 %v2328, %v2327
    %v2338 = vpack.c.b16 %v2330, %v2329
    %2347 = vmatpush.bf16.msra.mxu0 %v2338
    %2348 = vmatpush.bf16.msra.mxu0 %v2337
    %2349 = vmatpush.bf16.msra.mxu0 %v2336
    %2350 = vmatpush.bf16.msra.mxu0 %v2335
    %2351 = vmatpush.bf16.msra.mxu0 %v2334
    %2352 = vmatpush.bf16.msra.mxu0 %v2333
    %2353 = vmatpush.bf16.msra.mxu0 %v2332
    %2354 = vmatpush.bf16.msra.mxu0 %v2331
    %2355 = vmatmul.bf16.gmra.mxu0 %v2278
    %v2356 = vpop.f32.mrf.mxu0
    %v2357 = vadd.f32 %v2297, %v2356
    %v2358 = vpop.f32.mrf.mxu0
    %2359 = vdwg.mxu0
    %2360 = vst [vmem:[#allocation11] sm:$0xff] %v2357
    // Predicated region
    $region58: #{tpu_custom_call.1} parent=1 // pred_check
      _
    $region59: #{tpu_custom_call.1} parent=1 // pred_check_branch
      %2362 = sbr.rel (0) target = $region61
    $region60: #{tpu_custom_call.1} parent=1 // pred_region
      %2364 = vsyncadd [#allocation4], 0
      %s2366 = sshll.u32 [#allocation11], 4
      %s2367 = int_to_ptr.vmem [resolvable:$true] %s2366
      %s2368 = sshll.u32 %s9, 4
      %s2369 = int_to_ptr.hbm [resolvable:$true] %s2368
      %2371 = dma.vmem_to_hbm [thread:$0]  %s2367, 128, %s2369, [#allocation4]
    $region61: #{tpu_custom_call.1} parent=1 // pred_fallthru
      _
    // Predicated region
    $region62: #{tpu_custom_call.1} parent=1 // pred_check
      _
    $region63: #{tpu_custom_call.1} parent=1 // pred_check_branch
      %2373 = sbr.rel (0) target = $region65
    $region64: #{tpu_custom_call.1} parent=1 // pred_region
      %2375 = dma.done [#allocation4], 128
    $region65: #{tpu_custom_call.1} parent=1 // pred_fallthru
      _
    %2376 = vsyncpa [#allocation3], 1
    %2377 = vsyncpa [#allocation6], 1
    %2378 = vsyncpa [#allocation9], 1
    %2379 = vsyncpa [#allocation4], 1

</llo_original>
